<compile_context>
chip_gen: v6e
topology: v6e:2x2x1
jax: 0.10.0
libtpu: 0.0.40
codegen_flags: <defaults>
</compile_context>

<pallas_src>
import functools

import jax
import jax.numpy as jnp
from jax.experimental import pallas as pl
from jax.experimental.pallas import tpu as pltpu

# ---- hyperparameters (small, consistent with __C of the module) -------------
B = 2            # batch
S = 8            # sequence length
HIDDEN_SIZE = 32
FLAT_MLP_SIZE = 32
FLAT_GLIMPSES = 2
FLAT_OUT_SIZE = 64

LANE = 128
ROW_TILE = 8     # batch rows per grid step (f32 sublane tile)


def _round_up(n, m):
    return ((n + m - 1) // m) * m


def attflat_kernel(x_ref, mask_ref, w1_ref, w2_ref, w3_ref, bias_ref, out_ref,
                   *, n_glimpses, mid, out_pad):
    # x_ref:    (ROWS, S_pad, H)   bf16 activations (row tile of the batch)
    # mask_ref: (ROWS, S_pad, 1)   f32, 1.0 where masked
    # w1: (H, M) bf16, w2: (M, G) bf16, w3: (G, H, OUT_PAD) bf16
    # bias_ref: (3, BCOLS) f32  row0=b1[:M], row1=b2[:G], row2=b3[:OUT_PAD]
    # out_ref:  (ROWS, OUT_PAD) f32, lane-dense
    rows, s, h = x_ref.shape

    x3 = x_ref[...]                                   # (ROWS, S_pad, H) bf16
    # S_pad is a multiple of the sublane/packing tile -> layout no-op collapse.
    x2d = x3.reshape(rows * s, h)                     # (ROWS*S_pad, H)

    b1 = bias_ref[0:1, 0:mid]                         # (1, M)   f32
    b2 = bias_ref[1:2, 0:n_glimpses]                  # (1, G)   f32
    b3 = bias_ref[2:3, 0:out_pad]                     # (1, OUT_PAD) f32

    # --- MLP: Linear -> ReLU -> Linear (dropout = identity at eval) ----------
    hm = jnp.dot(x2d, w1_ref[...], preferred_element_type=jnp.float32) + b1
    hm = jnp.maximum(hm, 0.0)                         # (ROWS*S_pad, M) f32
    logits2d = jnp.dot(hm.astype(w2_ref.dtype), w2_ref[...],
                       preferred_element_type=jnp.float32) + b2
    logits = logits2d.reshape(rows, s, n_glimpses)    # (ROWS, S_pad, G) f32

    # --- masked_fill + softmax over the sequence axis (all f32, exact) -------
    mask = mask_ref[...]                              # (ROWS, S_pad, 1)
    logits = jnp.where(mask > 0.0, -1e9, logits)      # broadcast over glimpses
    m = jnp.max(logits, axis=1, keepdims=True)        # (ROWS, 1, G)
    e = jnp.exp(logits - m)                           # (ROWS, S_pad, G)
    denom = jnp.sum(e, axis=1, keepdims=True)         # (ROWS, 1, G)
    att = e / denom                                   # exact normalization

    # --- per-glimpse weighted sum as ONE batched MXU contraction -------------
    # torch: sum(att[:, :, g:g+1] * x, dim=1) for each g, then cat(dim=1).
    x_atted = jnp.einsum('bsg,bsh->bgh', att.astype(x3.dtype), x3,
                         preferred_element_type=jnp.float32)  # (ROWS, G, H)

    # --- linear_merge: w3 split per glimpse, accumulate (no lane concat) -----
    acc = b3                                          # (1, OUT_PAD) f32
    for g in range(n_glimpses):                       # G is small & static
        acc = acc + jnp.dot(x_atted[:, g, :].astype(w3_ref.dtype), w3_ref[g],
                            preferred_element_type=jnp.float32)
    out_ref[...] = acc.astype(out_ref.dtype)          # full-lane, unmasked store


def att_flat(x, mask_f, w1, b1, w2, b2, w3, b3, *, compute_dtype=jnp.bfloat16):
    """x: (B,S,H) f32, mask_f: (B,S,1) f32 (1.0 = masked). Returns (B, OUT) f32."""
    Bq, Sq, H = x.shape
    M = w1.shape[1]
    G = w2.shape[1]
    OUT = w3.shape[1]
    OUT_PAD = _round_up(OUT, LANE)                    # lane-dense output width
    BCOLS = _round_up(max(M, G, OUT_PAD), LANE)

    # Pad batch to a sublane multiple and sequence to the dtype packing tile
    # (16 for bf16, 8 for f32) so reshapes/stores are layout no-ops.
    seq_mult = 16 if compute_dtype == jnp.bfloat16 else 8
    B_pad = _round_up(Bq, ROW_TILE)
    S_pad = _round_up(Sq, seq_mult)

    x_p = jnp.zeros((B_pad, S_pad, H), compute_dtype)
    x_p = x_p.at[:Bq, :Sq, :].set(x.astype(compute_dtype))
    mask_p = jnp.ones((B_pad, S_pad, 1), jnp.float32)     # padded positions masked
    mask_p = mask_p.at[:Bq, :Sq, :].set(mask_f)

    # Weights: MXU operands in bf16; linear_merge pre-split per glimpse and
    # zero-padded to 128 output lanes (wrapper slices back to OUT).
    w1c = w1.astype(compute_dtype)
    w2c = w2.astype(compute_dtype)
    w3r = jnp.zeros((G, H, OUT_PAD), compute_dtype)
    w3r = w3r.at[:, :, :OUT].set(w3.reshape(G, H, OUT).astype(compute_dtype))

    # Pack the three tiny biases (kept f32) into one small operand.
    biases = jnp.zeros((3, BCOLS), jnp.float32)
    biases = biases.at[0, :M].set(jnp.reshape(b1, (-1,)))
    biases = biases.at[1, :G].set(jnp.reshape(b2, (-1,)))
    biases = biases.at[2, :OUT].set(jnp.reshape(b3, (-1,)))

    kernel = functools.partial(attflat_kernel, n_glimpses=G, mid=M,
                               out_pad=OUT_PAD)

    grid = (B_pad // ROW_TILE,)                       # (1,) at toy shapes
    out_padded = pl.pallas_call(
        kernel,
        out_shape=jax.ShapeDtypeStruct((B_pad, OUT_PAD), jnp.float32),
        grid_spec=pltpu.PrefetchScalarGridSpec(
            num_scalar_prefetch=0,
            grid=grid,
            in_specs=[
                pl.BlockSpec((ROW_TILE, S_pad, H), lambda i: (i, 0, 0)),  # x
                pl.BlockSpec((ROW_TILE, S_pad, 1), lambda i: (i, 0, 0)),  # mask
                pl.BlockSpec((H, M), lambda i: (0, 0)),                   # w1 (resident)
                pl.BlockSpec((M, G), lambda i: (0, 0)),                   # w2 (resident)
                pl.BlockSpec((G, H, OUT_PAD), lambda i: (0, 0, 0)),       # w3 (resident)
                pl.BlockSpec((3, BCOLS), lambda i: (0, 0)),               # biases
            ],
            out_specs=pl.BlockSpec((ROW_TILE, OUT_PAD), lambda i: (i, 0)),
        ),
        compiler_params=pltpu.CompilerParams(
            dimension_semantics=("parallel",),        # row axis -> 2 TCs on v7x
            vmem_limit_bytes=64 << 20,
        ),
    )(x_p, mask_p, w1c, w2c, w3r, biases)

    return out_padded[:Bq, :OUT]


def reference_f32(x, mask_bool, w1, b1, w2, b2, w3, b3, n_glimpses):
    """Pure-JAX mirror of the PyTorch forward (eval mode), full f32."""
    h = jax.nn.relu(x @ w1 + b1)
    att = h @ w2 + b2                                 # (B, S, G)
    att = jnp.where(mask_bool[:, :, None], -1e9, att)
    att = jax.nn.softmax(att, axis=1)
    parts = [jnp.sum(att[:, :, i:i + 1] * x, axis=1) for i in range(n_glimpses)]
    x_atted = jnp.concatenate(parts, axis=1)          # (B, G*H)
    return x_atted @ w3 + b3


def reference_bf16(x, mask_bool, w1, b1, w2, b2, w3, b3, n_glimpses,
                   dtype=jnp.bfloat16):
    """Mirror of the kernel's math (same bf16 casts at the dot boundaries)."""
    Bq, Sq, H = x.shape
    xb = x.astype(dtype)
    hm = jnp.dot(xb.reshape(Bq * Sq, H), w1.astype(dtype),
                 preferred_element_type=jnp.float32) + b1
    hm = jnp.maximum(hm, 0.0)
    logits = (jnp.dot(hm.astype(dtype), w2.astype(dtype),
                      preferred_element_type=jnp.float32) + b2
              ).reshape(Bq, Sq, n_glimpses)
    logits = jnp.where(mask_bool[:, :, None], -1e9, logits)
    m = jnp.max(logits, axis=1, keepdims=True)
    e = jnp.exp(logits - m)
    att = e / jnp.sum(e, axis=1, keepdims=True)
    x_atted = jnp.einsum('bsg,bsh->bgh', att.astype(dtype), xb,
                         preferred_element_type=jnp.float32)
    w3r = w3.reshape(n_glimpses, H, -1).astype(dtype)
    out = b3
    for g in range(n_glimpses):
        out = out + jnp.dot(x_atted[:, g, :].astype(dtype), w3r[g],
                            preferred_element_type=jnp.float32)
    return out


if __name__ == "__main__":
    key = jax.random.PRNGKey(0)
    k_x, k_w1, k_b1, k_w2, k_b2, k_w3, k_b3 = jax.random.split(key, 7)

    # deterministic inputs / parameters
    x = jax.random.normal(k_x, (B, S, HIDDEN_SIZE), dtype=jnp.float32)

    # mask: last positions of each sequence are padding (True = masked)
    valid_lens = jnp.array([6, 5], dtype=jnp.int32)   # per-batch valid length
    pos = jnp.arange(S)[None, :]
    mask_bool = pos >= valid_lens[:, None]            # (B, S) bool
    mask_f = mask_bool.astype(jnp.float32)[:, :, None]  # (B, S, 1) for the kernel

    scale = 0.1
    w1 = scale * jax.random.normal(k_w1, (HIDDEN_SIZE, FLAT_MLP_SIZE), dtype=jnp.float32)
    b1 = scale * jax.random.normal(k_b1, (1, FLAT_MLP_SIZE), dtype=jnp.float32)
    w2 = scale * jax.random.normal(k_w2, (FLAT_MLP_SIZE, FLAT_GLIMPSES), dtype=jnp.float32)
    b2 = scale * jax.random.normal(k_b2, (1, FLAT_GLIMPSES), dtype=jnp.float32)
    w3 = scale * jax.random.normal(k_w3, (HIDDEN_SIZE * FLAT_GLIMPSES, FLAT_OUT_SIZE),
                                   dtype=jnp.float32)
    b3 = scale * jax.random.normal(k_b3, (1, FLAT_OUT_SIZE), dtype=jnp.float32)

    out = att_flat(x, mask_f, w1, b1, w2, b2, w3, b3)
    out = jax.block_until_ready(out)
    assert out.shape == (B, FLAT_OUT_SIZE), out.shape

    # (1) Tight structural check against a reference using the *same* bf16
    #     MXU-operand casts (difference is only accumulation order, ~1e-5).
    ref_b = reference_bf16(x, mask_bool, w1, b1, w2, b2, w3, b3, FLAT_GLIMPSES)
    assert jnp.allclose(out, ref_b, atol=2e-3, rtol=2e-3), \
        f"bf16-mirror max abs err {jnp.max(jnp.abs(out - ref_b))}"

    # (2) Sanity bound against the full-f32 PyTorch mirror; slack covers only
    #     the bf16 quantization of the MXU operands (softmax itself is exact).
    ref_f = reference_f32(x, mask_bool, w1, b1, w2, b2, w3, b3, FLAT_GLIMPSES)
    assert jnp.allclose(out, ref_f, atol=6e-2, rtol=6e-2), \
        f"f32 max abs err {jnp.max(jnp.abs(out - ref_f))}"

    print("KERNEL_OK")
</pallas_src>

<mosaic_0001>
module attributes {stable_mosaic.version = 11 : i64} {
  func.func @attflat_kernel(%arg0: i32, %arg1: memref<8x16x32xbf16, #tpu.memory_space<vmem>>, %arg2: memref<8x16x1xf32, #tpu.memory_space<vmem>>, %arg3: memref<32x32xbf16, #tpu.memory_space<vmem>>, %arg4: memref<32x2xbf16, #tpu.memory_space<vmem>>, %arg5: memref<2x32x128xbf16, #tpu.memory_space<vmem>>, %arg6: memref<3x128xf32, #tpu.memory_space<vmem>>, %arg7: memref<8x128xf32, #tpu.memory_space<vmem>>) attributes {dimension_semantics = [#tpu.dimension_semantics<parallel>], iteration_bounds = array<i64: 1>, scalar_prefetch = 0 : i64, scratch_operands = 0 : i64, tpu.core_type = #tpu.core_type<tc>, window_params = [{transform_indices = @transform_0, window_bounds = array<i64: 8, 16, 32>}, {transform_indices = @transform_1, window_bounds = array<i64: 8, 16, 1>}, {pipeline_mode = #tpu.pipeline_mode<synchronous>, transform_indices = @transform_2, window_bounds = array<i64: 32, 32>}, {pipeline_mode = #tpu.pipeline_mode<synchronous>, transform_indices = @transform_3, window_bounds = array<i64: 32, 2>}, {pipeline_mode = #tpu.pipeline_mode<synchronous>, transform_indices = @transform_4, window_bounds = array<i64: 2, 32, 128>}, {pipeline_mode = #tpu.pipeline_mode<synchronous>, transform_indices = @transform_5, window_bounds = array<i64: 3, 128>}, {transform_indices = @transform_6, window_bounds = array<i64: 8, 128>}]} {
    %c0 = arith.constant 0 : index
    %c0_0 = arith.constant 0 : index
    %c0_1 = arith.constant 0 : index
    %0 = vector.load %arg1[%c0, %c0_0, %c0_1] : memref<8x16x32xbf16, #tpu.memory_space<vmem>>, vector<8x16x32xbf16>
    %1 = vector.shape_cast %0 : vector<8x16x32xbf16> to vector<128x32xbf16>
    %c0_2 = arith.constant 0 : index
    %c0_3 = arith.constant 0 : index
    %2 = vector.load %arg6[%c0_2, %c0_3] : memref<3x128xf32, #tpu.memory_space<vmem>>, vector<1x32xf32>
    %c1 = arith.constant 1 : index
    %c0_4 = arith.constant 0 : index
    %3 = vector.load %arg6[%c1, %c0_4] : memref<3x128xf32, #tpu.memory_space<vmem>>, vector<1x2xf32>
    %c2 = arith.constant 2 : index
    %c0_5 = arith.constant 0 : index
    %4 = vector.load %arg6[%c2, %c0_5] : memref<3x128xf32, #tpu.memory_space<vmem>>, vector<1x128xf32>
    %c0_6 = arith.constant 0 : index
    %c0_7 = arith.constant 0 : index
    %5 = vector.load %arg3[%c0_6, %c0_7] : memref<32x32xbf16, #tpu.memory_space<vmem>>, vector<32x32xbf16>
    %cst = arith.constant dense<0.000000e+00> : vector<128x32xf32>
    %6 = tpu.matmul %1, %5, %cst {dimension_numbers = #tpu.dot_dimension_numbers<[1], [0], [0], [1], [0, 0, 1, 1], [], []>} : vector<128x32xbf16>, vector<32x32xbf16>, vector<128x32xf32> -> vector<128x32xf32>
    %7 = vector.broadcast %2 : vector<1x32xf32> to vector<128x32xf32>
    %8 = arith.addf %6, %7 : vector<128x32xf32>
    %cst_8 = arith.constant 0.000000e+00 : f32
    %9 = vector.broadcast %cst_8 : f32 to vector<128x32xf32>
    %10 = arith.maximumf %8, %9 : vector<128x32xf32>
    %11 = arith.truncf %10 : vector<128x32xf32> to vector<128x32xbf16>
    %c0_9 = arith.constant 0 : index
    %c0_10 = arith.constant 0 : index
    %12 = vector.load %arg4[%c0_9, %c0_10] : memref<32x2xbf16, #tpu.memory_space<vmem>>, vector<32x2xbf16>
    %cst_11 = arith.constant dense<0.000000e+00> : vector<128x2xf32>
    %13 = tpu.matmul %11, %12, %cst_11 {dimension_numbers = #tpu.dot_dimension_numbers<[1], [0], [0], [1], [0, 0, 1, 1], [], []>} : vector<128x32xbf16>, vector<32x2xbf16>, vector<128x2xf32> -> vector<128x2xf32>
    %14 = vector.broadcast %3 : vector<1x2xf32> to vector<128x2xf32>
    %15 = arith.addf %13, %14 : vector<128x2xf32>
    %16 = vector.shape_cast %15 : vector<128x2xf32> to vector<8x16x2xf32>
    %c0_12 = arith.constant 0 : index
    %c0_13 = arith.constant 0 : index
    %c0_14 = arith.constant 0 : index
    %17 = vector.load %arg2[%c0_12, %c0_13, %c0_14] : memref<8x16x1xf32, #tpu.memory_space<vmem>>, vector<8x16x1xf32>
    %cst_15 = arith.constant 0.000000e+00 : f32
    %18 = vector.broadcast %cst_15 : f32 to vector<8x16x1xf32>
    %19 = arith.cmpf ogt, %17, %18 : vector<8x16x1xf32>
    %cst_16 = arith.constant -1.000000e+09 : f32
    %20 = vector.shape_cast %19 : vector<8x16x1xi1> to vector<8x16x1xi1>
    %21 = vector.broadcast %20 : vector<8x16x1xi1> to vector<8x16x2xi1>
    %22 = vector.broadcast %cst_16 : f32 to vector<8x16x2xf32>
    %23 = arith.select %21, %22, %16 : vector<8x16x2xi1>, vector<8x16x2xf32>
    %cst_17 = arith.constant dense<0xFF800000> : vector<8x2xf32>
    %24 = vector.multi_reduction <maximumf>, %23, %cst_17 [1] : vector<8x16x2xf32> to vector<8x2xf32>
    %25 = vector.shape_cast %24 : vector<8x2xf32> to vector<8x1x2xf32>
    %26 = vector.broadcast %25 : vector<8x1x2xf32> to vector<8x16x2xf32>
    %27 = arith.subf %23, %26 : vector<8x16x2xf32>
    %28 = math.exp %27 : vector<8x16x2xf32>
    %cst_18 = arith.constant dense<0.000000e+00> : vector<8x2xf32>
    %29 = vector.multi_reduction <add>, %28, %cst_18 [1] : vector<8x16x2xf32> to vector<8x2xf32>
    %30 = vector.shape_cast %29 : vector<8x2xf32> to vector<8x1x2xf32>
    %31 = vector.broadcast %30 : vector<8x1x2xf32> to vector<8x16x2xf32>
    %32 = arith.divf %28, %31 : vector<8x16x2xf32>
    %33 = arith.truncf %32 : vector<8x16x2xf32> to vector<8x16x2xbf16>
    "tpu.trace_start"() <{level = 10 : i32, message = "bsg,bsh->bgh"}> : () -> ()
    %cst_19 = arith.constant dense<0.000000e+00> : vector<8x2x32xf32>
    %34 = tpu.matmul %33, %0, %cst_19 {dimension_numbers = #tpu.dot_dimension_numbers<[1], [1], [2], [2], [0, 0, 0, 2, 1, 2], [0], [0]>} : vector<8x16x2xbf16>, vector<8x16x32xbf16>, vector<8x2x32xf32> -> vector<8x2x32xf32>
    "tpu.trace_stop"() : () -> ()
    %35 = vector.extract_strided_slice %34 {offsets = [0, 0, 0], sizes = [8, 1, 32], strides = [1, 1, 1]} : vector<8x2x32xf32> to vector<8x1x32xf32>
    %36 = vector.shape_cast %35 : vector<8x1x32xf32> to vector<8x32xf32>
    %37 = arith.truncf %36 : vector<8x32xf32> to vector<8x32xbf16>
    %c0_20 = arith.constant 0 : index
    %c0_21 = arith.constant 0 : index
    %c0_22 = arith.constant 0 : index
    %38 = vector.load %arg5[%c0_20, %c0_21, %c0_22] : memref<2x32x128xbf16, #tpu.memory_space<vmem>>, vector<1x32x128xbf16>
    %39 = vector.shape_cast %38 : vector<1x32x128xbf16> to vector<32x128xbf16>
    %cst_23 = arith.constant dense<0.000000e+00> : vector<8x128xf32>
    %40 = tpu.matmul %37, %39, %cst_23 {dimension_numbers = #tpu.dot_dimension_numbers<[1], [0], [0], [1], [0, 0, 1, 1], [], []>} : vector<8x32xbf16>, vector<32x128xbf16>, vector<8x128xf32> -> vector<8x128xf32>
    %41 = vector.broadcast %4 : vector<1x128xf32> to vector<8x128xf32>
    %42 = arith.addf %41, %40 : vector<8x128xf32>
    %43 = vector.extract_strided_slice %34 {offsets = [0, 1, 0], sizes = [8, 1, 32], strides = [1, 1, 1]} : vector<8x2x32xf32> to vector<8x1x32xf32>
    %44 = vector.shape_cast %43 : vector<8x1x32xf32> to vector<8x32xf32>
    %45 = arith.truncf %44 : vector<8x32xf32> to vector<8x32xbf16>
    %c1_24 = arith.constant 1 : index
    %c0_25 = arith.constant 0 : index
    %c0_26 = arith.constant 0 : index
    %46 = vector.load %arg5[%c1_24, %c0_25, %c0_26] : memref<2x32x128xbf16, #tpu.memory_space<vmem>>, vector<1x32x128xbf16>
    %47 = vector.shape_cast %46 : vector<1x32x128xbf16> to vector<32x128xbf16>
    %cst_27 = arith.constant dense<0.000000e+00> : vector<8x128xf32>
    %48 = tpu.matmul %45, %47, %cst_27 {dimension_numbers = #tpu.dot_dimension_numbers<[1], [0], [0], [1], [0, 0, 1, 1], [], []>} : vector<8x32xbf16>, vector<32x128xbf16>, vector<8x128xf32> -> vector<8x128xf32>
    %49 = arith.addf %42, %48 : vector<8x128xf32>
    %c0_28 = arith.constant 0 : index
    %c0_29 = arith.constant 0 : index
    %50 = vector.load %arg7[%c0_28, %c0_29] : memref<8x128xf32, #tpu.memory_space<vmem>>, vector<8x128xf32>
    tpu.vector_store %arg7[%c0_28, %c0_29], %49 {strides = array<i32>} : memref<8x128xf32, #tpu.memory_space<vmem>>, vector<8x128xf32>,
    return
  }
  func.func @transform_0(%arg0: i32) -> (i32, i32, i32) {
    %c0_i32 = arith.constant 0 : i32
    %c0_i32_0 = arith.constant 0 : i32
    %c0_i32_1 = arith.constant 0 : i32
    return %arg0, %c0_i32, %c0_i32_0 : i32, i32, i32
  }
  func.func @transform_1(%arg0: i32) -> (i32, i32, i32) {
    %c0_i32 = arith.constant 0 : i32
    %c0_i32_0 = arith.constant 0 : i32
    %c0_i32_1 = arith.constant 0 : i32
    return %arg0, %c0_i32, %c0_i32_0 : i32, i32, i32
  }
  func.func @transform_2(%arg0: i32) -> (i32, i32) {
    %c0_i32 = arith.constant 0 : i32
    %c0_i32_0 = arith.constant 0 : i32
    %c0_i32_1 = arith.constant 0 : i32
    return %c0_i32, %c0_i32_0 : i32, i32
  }
  func.func @transform_3(%arg0: i32) -> (i32, i32) {
    %c0_i32 = arith.constant 0 : i32
    %c0_i32_0 = arith.constant 0 : i32
    %c0_i32_1 = arith.constant 0 : i32
    return %c0_i32, %c0_i32_0 : i32, i32
  }
  func.func @transform_4(%arg0: i32) -> (i32, i32, i32) {
    %c0_i32 = arith.constant 0 : i32
    %c0_i32_0 = arith.constant 0 : i32
    %c0_i32_1 = arith.constant 0 : i32
    %c0_i32_2 = arith.constant 0 : i32
    return %c0_i32, %c0_i32_0, %c0_i32_1 : i32, i32, i32
  }
  func.func @transform_5(%arg0: i32) -> (i32, i32) {
    %c0_i32 = arith.constant 0 : i32
    %c0_i32_0 = arith.constant 0 : i32
    %c0_i32_1 = arith.constant 0 : i32
    return %c0_i32, %c0_i32_0 : i32, i32
  }
  func.func @transform_6(%arg0: i32) -> (i32, i32) {
    %c0_i32 = arith.constant 0 : i32
    %c0_i32_0 = arith.constant 0 : i32
    return %arg0, %c0_i32 : i32, i32
  }
}

</mosaic_0001>

<llo_original>
// kernel: tpu_custom_call.1
$region0: #{tpu_custom_call.1}
  #allocation0 [shape = 'u32[]', space=smem, size = 0x4, offset = 0x4, fixed_abs, tag = 'smem constant byte address 0x4 - core index']
  #allocation1 [shape = 'u32[144,128]{1,0:T(1,128)}', space=vmem, size = 0x12000, scoped, tag = 'internal scratch']
  %s0 = inlined_call_operand.vmem [shape: bf16[8,16,32], index: 0, kind: input, shape index: {}]
  %s1 = inlined_call_operand.vmem [shape: f32[8,16,1], index: 1, kind: input, shape index: {}]
  %s2 = inlined_call_operand.vmem [shape: bf16[32,32], index: 2, kind: input, shape index: {}]
  %s3 = inlined_call_operand.vmem [shape: bf16[32,2], index: 3, kind: input, shape index: {}]
  %s4 = inlined_call_operand.vmem [shape: bf16[2,32,128], index: 4, kind: input, shape index: {}]
  %s5 = inlined_call_operand.vmem [shape: f32[3,128], index: 5, kind: input, shape index: {}]
  %s6 = inlined_call_operand.hbm [shape: f32[8,128], index: 6, kind: output, shape index: {}]
  %s7 = sld [smem:[#allocation0]]
  $region34: #{tpu_custom_call.1} parent=0
    _
  %s9 = ssub.s32 1, %s7
  %s10 = scalar_select 0, %s9, %s7
  $region1: #{tpu_custom_call.1} parent=0
    #allocation2 [shape = 'u8[4096]{0}', space=vmem, size = 0x1000, scoped, tag = 'output window, operand 0, single buffered']
    #allocation3 [shape = 's32[1]{0}', space=sflag, size = 0x4, scoped, tag = 'scoped memory for tpu_custom_call.1']
    %11 = vsyncpa [#allocation3], 0
    // Predicated region
    $region2: #{tpu_custom_call.1} parent=1 // pred_check
      _
    $region3: #{tpu_custom_call.1} parent=1 // pred_check_branch
      %13 = sbr.rel (0) target = $region5
    $region4: #{tpu_custom_call.1} parent=1 // pred_region
      _
    $region5: #{tpu_custom_call.1} parent=1 // pred_fallthru
      _
    // Predicated region
    $region6: #{tpu_custom_call.1} parent=1 // pred_check
      _
    $region7: #{tpu_custom_call.1} parent=1 // pred_check_branch
      %15 = sbr.rel (0) target = $region9
    $region8: #{tpu_custom_call.1} parent=1 // pred_region
      _
    $region9: #{tpu_custom_call.1} parent=1 // pred_fallthru
      _
    // Predicated region
    $region10: #{tpu_custom_call.1} parent=1 // pred_check
      _
    $region11: #{tpu_custom_call.1} parent=1 // pred_check_branch
      %17 = sbr.rel (0) target = $region13
    $region12: #{tpu_custom_call.1} parent=1 // pred_region
      _
    $region13: #{tpu_custom_call.1} parent=1 // pred_fallthru
      _
    // Predicated region
    $region14: #{tpu_custom_call.1} parent=1 // pred_check
      _
    $region15: #{tpu_custom_call.1} parent=1 // pred_check_branch
      %19 = sbr.rel (0) target = $region17
    $region16: #{tpu_custom_call.1} parent=1 // pred_region
      _
    $region17: #{tpu_custom_call.1} parent=1 // pred_fallthru
      _
    // Predicated region
    $region18: #{tpu_custom_call.1} parent=1 // pred_check
      _
    $region19: #{tpu_custom_call.1} parent=1 // pred_check_branch
      %21 = sbr.rel (0) target = $region21
    $region20: #{tpu_custom_call.1} parent=1 // pred_region
      _
    $region21: #{tpu_custom_call.1} parent=1 // pred_fallthru
      _
    // Predicated region
    $region22: #{tpu_custom_call.1} parent=1 // pred_check
      _
    $region23: #{tpu_custom_call.1} parent=1 // pred_check_branch
      %23 = sbr.rel (0) target = $region25
    $region24: #{tpu_custom_call.1} parent=1 // pred_region
      _
    $region25: #{tpu_custom_call.1} parent=1 // pred_fallthru
      _
    %v25 = vld [vmem:[%s0] sm:$0xf]
    %v26 = vld [vmem:[%s0 + $0x4] sm:$0xf]
    %v27 = vld [vmem:[%s0 + $0x8] sm:$0xf]
    %v28 = vld [vmem:[%s0 + $0xc] sm:$0xf]
    %v29 = vld [vmem:[%s0 + $0x10] sm:$0xf]
    %v30 = vld [vmem:[%s0 + $0x14] sm:$0xf]
    %v31 = vld [vmem:[%s0 + $0x18] sm:$0xf]
    %v32 = vld [vmem:[%s0 + $0x1c] sm:$0xf]
    %v33 = vld [vmem:[%s0 + $0x20] sm:$0xf]
    %v34 = vld [vmem:[%s0 + $0x24] sm:$0xf]
    %v35 = vld [vmem:[%s0 + $0x28] sm:$0xf]
    %v36 = vld [vmem:[%s0 + $0x2c] sm:$0xf]
    %v37 = vld [vmem:[%s0 + $0x30] sm:$0xf]
    %v38 = vld [vmem:[%s0 + $0x34] sm:$0xf]
    %v39 = vld [vmem:[%s0 + $0x38] sm:$0xf]
    %v40 = vld [vmem:[%s0 + $0x3c] sm:$0xf]
    %v41 = vld [vmem:[%s5] sm:$0x1]
    %v42 = vld [vmem:[%s5 + $0x1] sm:$0x1]
    %v43 = vld [vmem:[%s5 + $0x2] sm:$0x1]
    %v44 = vld [vmem:[%s2] sm:$0xf]
    %v45 = vld [vmem:[%s2 + $0x4] sm:$0xf]
    %v46 = vld [vmem:[%s2 + $0x8] sm:$0xf]
    %v47 = vld [vmem:[%s2 + $0xc] sm:$0xf]
    %v48 = vlaneseq
    %v49 = vshrl.u32 %v48, 7
    %v50 = vsub.s32 0, %v49
    %v51 = vrot.slane %v41, %v50
    %v68 = vunpack.c.l.b16 %v25
    %v69 = vunpack.c.l.b16 %v26
    %v70 = vunpack.c.l.b16 %v27
    %v71 = vunpack.c.l.b16 %v28
    %v72 = vunpack.c.l.b16 %v29
    %v73 = vunpack.c.l.b16 %v30
    %v74 = vunpack.c.l.b16 %v31
    %v75 = vunpack.c.l.b16 %v32
    %v76 = vunpack.c.l.b16 %v33
    %v77 = vunpack.c.l.b16 %v34
    %v78 = vunpack.c.l.b16 %v35
    %v79 = vunpack.c.l.b16 %v36
    %v80 = vunpack.c.l.b16 %v37
    %v81 = vunpack.c.l.b16 %v38
    %v82 = vunpack.c.l.b16 %v39
    %v83 = vunpack.c.l.b16 %v40
    %v84 = vpack.c.b16 %v69, %v68
    %v85 = vpack.c.b16 %v71, %v70
    %v86 = vpack.c.b16 %v73, %v72
    %v87 = vpack.c.b16 %v75, %v74
    %v88 = vpack.c.b16 %v77, %v76
    %v89 = vpack.c.b16 %v79, %v78
    %v90 = vpack.c.b16 %v81, %v80
    %v91 = vpack.c.b16 %v83, %v82
    %v96 = vunpack.c.l.b16 %v44
    %v97 = vunpack.c.l.b16 %v45
    %v98 = vunpack.c.l.b16 %v46
    %v99 = vunpack.c.l.b16 %v47
    %v100 = vpack.c.b16 %v97, %v96
    %v101 = vpack.c.b16 %v99, %v98
    %vm104 = vcmask 261120
    %v106 = vsel %vm104, %v84, 0
    %v109 = vsel %vm104, %v85, 0
    %v112 = vsel %vm104, %v86, 0
    %v115 = vsel %vm104, %v87, 0
    %v118 = vsel %vm104, %v88, 0
    %v121 = vsel %vm104, %v89, 0
    %v124 = vsel %vm104, %v90, 0
    %v127 = vsel %vm104, %v91, 0
    %129 = vmatprep.subr.bf16.mxu0 0
    %130 = vmatpush1.bf16.msra.mxu0 0
    %131 = vmatprep.subr.bf16.mxu0 0
    %132 = vmatpush1.bf16.msra.mxu0 0
    %133 = vmatprep.subr.bf16.mxu0 0
    %134 = vmatpush1.bf16.msra.mxu0 0
    %135 = vmatprep.subr.bf16.mxu0 0
    %136 = vmatpush1.bf16.msra.mxu0 0
    %137 = vmatprep.subr.bf16.mxu0 0
    %138 = vmatpush1.bf16.msra.mxu0 0
    %139 = vmatprep.subr.bf16.mxu0 0
    %140 = vmatpush1.bf16.msra.mxu0 0
    %141 = vmatprep.subr.bf16.mxu0 0
    %142 = vmatpush1.bf16.msra.mxu0 %v101
    %143 = vmatprep.subr.bf16.mxu0 0
    %144 = vmatpush1.bf16.msra.mxu0 %v100
    %145 = vmatprep.subr.bf16.mxu0 0
    %146 = vmatpush2.bf16.msra.mxu0 0
    %147 = vmatprep.subr.bf16.mxu0 0
    %148 = vmatpush2.bf16.msra.mxu0 0
    %149 = vmatprep.subr.bf16.mxu0 0
    %150 = vmatpush2.bf16.msra.mxu0 0
    %151 = vmatprep.subr.bf16.mxu0 0
    %152 = vmatpush2.bf16.msra.mxu0 0
    %153 = vmatprep.subr.bf16.mxu0 0
    %154 = vmatpush2.bf16.msra.mxu0 0
    %155 = vmatprep.subr.bf16.mxu0 0
    %156 = vmatpush2.bf16.msra.mxu0 0
    %157 = vmatprep.subr.bf16.mxu0 0
    %158 = vmatpush2.bf16.msra.mxu0 0
    %159 = vmatprep.subr.bf16.mxu0 0
    %160 = vmatpush2.bf16.msra.mxu0 0
    %161 = vmatprep.mubr.bf16.mxu0 0
    %162 = vmatmul.mubr.bf16.gmra.mxu0 %v106
    %v163 = vpop.f32.mrf.mxu0
    %v164 = vadd.f32 %v51, %v163
    %v165 = vpop.f32.mrf.mxu0
    %v166 = vpop.f32.mrf.mxu0
    %v167 = vadd.f32 %v51, %v166
    %v168 = vpop.f32.mrf.mxu0
    %169 = vmatprep.mubr.bf16.mxu0 0
    %170 = vmatmul.mubr.bf16.gmra.mxu0 %v109
    %v171 = vpop.f32.mrf.mxu0
    %v172 = vadd.f32 %v51, %v171
    %v173 = vpop.f32.mrf.mxu0
    %v174 = vpop.f32.mrf.mxu0
    %v175 = vadd.f32 %v51, %v174
    %v176 = vpop.f32.mrf.mxu0
    %177 = vmatprep.mubr.bf16.mxu0 0
    %178 = vmatmul.mubr.bf16.gmra.mxu0 %v112
    %v179 = vpop.f32.mrf.mxu0
    %v180 = vadd.f32 %v51, %v179
    %v181 = vpop.f32.mrf.mxu0
    %v182 = vpop.f32.mrf.mxu0
    %v183 = vadd.f32 %v51, %v182
    %v184 = vpop.f32.mrf.mxu0
    %185 = vmatprep.mubr.bf16.mxu0 0
    %186 = vmatmul.mubr.bf16.gmra.mxu0 %v115
    %v187 = vpop.f32.mrf.mxu0
    %v188 = vadd.f32 %v51, %v187
    %v189 = vpop.f32.mrf.mxu0
    %v190 = vpop.f32.mrf.mxu0
    %v191 = vadd.f32 %v51, %v190
    %v192 = vpop.f32.mrf.mxu0
    %193 = vmatprep.mubr.bf16.mxu0 0
    %194 = vmatmul.mubr.bf16.gmra.mxu0 %v118
    %v195 = vpop.f32.mrf.mxu0
    %v196 = vadd.f32 %v51, %v195
    %v197 = vpop.f32.mrf.mxu0
    %v198 = vpop.f32.mrf.mxu0
    %v199 = vadd.f32 %v51, %v198
    %v200 = vpop.f32.mrf.mxu0
    %201 = vmatprep.mubr.bf16.mxu0 0
    %202 = vmatmul.mubr.bf16.gmra.mxu0 %v121
    %v203 = vpop.f32.mrf.mxu0
    %v204 = vadd.f32 %v51, %v203
    %v205 = vpop.f32.mrf.mxu0
    %v206 = vpop.f32.mrf.mxu0
    %v207 = vadd.f32 %v51, %v206
    %v208 = vpop.f32.mrf.mxu0
    %209 = vmatprep.mubr.bf16.mxu0 0
    %210 = vmatmul.mubr.bf16.gmra.mxu0 %v124
    %v211 = vpop.f32.mrf.mxu0
    %v212 = vadd.f32 %v51, %v211
    %v213 = vpop.f32.mrf.mxu0
    %v214 = vpop.f32.mrf.mxu0
    %v215 = vadd.f32 %v51, %v214
    %v216 = vpop.f32.mrf.mxu0
    %217 = vmatprep.mubr.bf16.mxu0 0
    %218 = vmatmul.mubr.bf16.gmra.mxu0 %v127
    %v219 = vpop.f32.mrf.mxu0
    %v220 = vadd.f32 %v51, %v219
    %v221 = vpop.f32.mrf.mxu0
    %v222 = vpop.f32.mrf.mxu0
    %v223 = vadd.f32 %v51, %v222
    %v224 = vpop.f32.mrf.mxu0
    %225 = vdwg.mxu0
    %v226 = vmax.f32 %v164, 0.0
    %v227 = vmax.f32 %v167, 0.0
    %v228 = vmax.f32 %v172, 0.0
    %v229 = vmax.f32 %v175, 0.0
    %v230 = vmax.f32 %v180, 0.0
    %v231 = vmax.f32 %v183, 0.0
    %v232 = vmax.f32 %v188, 0.0
    %v233 = vmax.f32 %v191, 0.0
    %v234 = vmax.f32 %v196, 0.0
    %v235 = vmax.f32 %v199, 0.0
    %v236 = vmax.f32 %v204, 0.0
    %v237 = vmax.f32 %v207, 0.0
    %v238 = vmax.f32 %v212, 0.0
    %v239 = vmax.f32 %v215, 0.0
    %v240 = vmax.f32 %v220, 0.0
    %v241 = vmax.f32 %v223, 0.0
    %v242 = vpack.c.bf16 %v227, %v226
    %v243 = vpack.c.bf16 %v229, %v228
    %v244 = vpack.c.bf16 %v231, %v230
    %v245 = vpack.c.bf16 %v233, %v232
    %v246 = vpack.c.bf16 %v235, %v234
    %v247 = vpack.c.bf16 %v237, %v236
    %v248 = vpack.c.bf16 %v239, %v238
    %v249 = vpack.c.bf16 %v241, %v240
    %v250 = vld [vmem:[%s3] sm:$0xf]
    %v251 = vld [vmem:[%s3 + $0x4] sm:$0xf]
    %v252 = vld [vmem:[%s3 + $0x8] sm:$0xf]
    %v253 = vld [vmem:[%s3 + $0xc] sm:$0xf]
    %v254 = vlaneseq
    %v255 = vshrl.u32 %v254, 7
    %v256 = vsub.s32 0, %v255
    %v257 = vrot.slane %v42, %v256
    %v262 = vunpack.c.l.b16 %v250
    %v263 = vunpack.c.l.b16 %v251
    %v264 = vunpack.c.l.b16 %v252
    %v265 = vunpack.c.l.b16 %v253
    %v266 = vpack.c.b16 %v263, %v262
    %v267 = vpack.c.b16 %v265, %v264
    %v271 = vsel %vm104, %v242, 0
    %v274 = vsel %vm104, %v243, 0
    %v277 = vsel %vm104, %v244, 0
    %v280 = vsel %vm104, %v245, 0
    %v283 = vsel %vm104, %v246, 0
    %v286 = vsel %vm104, %v247, 0
    %v289 = vsel %vm104, %v248, 0
    %v292 = vsel %vm104, %v249, 0
    %294 = vmatprep.subr.bf16.mxu0 0
    %295 = vmatpush1.bf16.msra.mxu0 0
    %296 = vmatprep.subr.bf16.mxu0 0
    %297 = vmatpush1.bf16.msra.mxu0 0
    %298 = vmatprep.subr.bf16.mxu0 0
    %299 = vmatpush1.bf16.msra.mxu0 0
    %300 = vmatprep.subr.bf16.mxu0 0
    %301 = vmatpush1.bf16.msra.mxu0 0
    %302 = vmatprep.subr.bf16.mxu0 0
    %303 = vmatpush1.bf16.msra.mxu0 0
    %304 = vmatprep.subr.bf16.mxu0 0
    %305 = vmatpush1.bf16.msra.mxu0 0
    %306 = vmatprep.subr.bf16.mxu0 0
    %307 = vmatpush1.bf16.msra.mxu0 %v267
    %308 = vmatprep.subr.bf16.mxu0 0
    %309 = vmatpush1.bf16.msra.mxu0 %v266
    %310 = vmatprep.subr.bf16.mxu0 0
    %311 = vmatpush2.bf16.msra.mxu0 0
    %312 = vmatprep.subr.bf16.mxu0 0
    %313 = vmatpush2.bf16.msra.mxu0 0
    %314 = vmatprep.subr.bf16.mxu0 0
    %315 = vmatpush2.bf16.msra.mxu0 0
    %316 = vmatprep.subr.bf16.mxu0 0
    %317 = vmatpush2.bf16.msra.mxu0 0
    %318 = vmatprep.subr.bf16.mxu0 0
    %319 = vmatpush2.bf16.msra.mxu0 0
    %320 = vmatprep.subr.bf16.mxu0 0
    %321 = vmatpush2.bf16.msra.mxu0 0
    %322 = vmatprep.subr.bf16.mxu0 0
    %323 = vmatpush2.bf16.msra.mxu0 0
    %324 = vmatprep.subr.bf16.mxu0 0
    %325 = vmatpush2.bf16.msra.mxu0 0
    %326 = vmatprep.mubr.bf16.mxu0 0
    %327 = vmatmul.mubr.bf16.gmra.mxu0 %v271
    %v328 = vpop.f32.mrf.mxu0
    %v329 = vadd.f32 %v257, %v328
    %v330 = vpop.f32.mrf.mxu0
    %v331 = vpop.f32.mrf.mxu0
    %v332 = vadd.f32 %v257, %v331
    %v333 = vpop.f32.mrf.mxu0
    %334 = vmatprep.mubr.bf16.mxu0 0
    %335 = vmatmul.mubr.bf16.gmra.mxu0 %v274
    %v336 = vpop.f32.mrf.mxu0
    %v337 = vadd.f32 %v257, %v336
    %v338 = vpop.f32.mrf.mxu0
    %v339 = vpop.f32.mrf.mxu0
    %v340 = vadd.f32 %v257, %v339
    %v341 = vpop.f32.mrf.mxu0
    %342 = vmatprep.mubr.bf16.mxu0 0
    %343 = vmatmul.mubr.bf16.gmra.mxu0 %v277
    %v344 = vpop.f32.mrf.mxu0
    %v345 = vadd.f32 %v257, %v344
    %v346 = vpop.f32.mrf.mxu0
    %v347 = vpop.f32.mrf.mxu0
    %v348 = vadd.f32 %v257, %v347
    %v349 = vpop.f32.mrf.mxu0
    %350 = vmatprep.mubr.bf16.mxu0 0
    %351 = vmatmul.mubr.bf16.gmra.mxu0 %v280
    %v352 = vpop.f32.mrf.mxu0
    %v353 = vadd.f32 %v257, %v352
    %v354 = vpop.f32.mrf.mxu0
    %v355 = vpop.f32.mrf.mxu0
    %v356 = vadd.f32 %v257, %v355
    %v357 = vpop.f32.mrf.mxu0
    %358 = vmatprep.mubr.bf16.mxu0 0
    %359 = vmatmul.mubr.bf16.gmra.mxu0 %v283
    %v360 = vpop.f32.mrf.mxu0
    %v361 = vadd.f32 %v257, %v360
    %v362 = vpop.f32.mrf.mxu0
    %v363 = vpop.f32.mrf.mxu0
    %v364 = vadd.f32 %v257, %v363
    %v365 = vpop.f32.mrf.mxu0
    %366 = vmatprep.mubr.bf16.mxu0 0
    %367 = vmatmul.mubr.bf16.gmra.mxu0 %v286
    %v368 = vpop.f32.mrf.mxu0
    %v369 = vadd.f32 %v257, %v368
    %v370 = vpop.f32.mrf.mxu0
    %v371 = vpop.f32.mrf.mxu0
    %v372 = vadd.f32 %v257, %v371
    %v373 = vpop.f32.mrf.mxu0
    %374 = vmatprep.mubr.bf16.mxu0 0
    %375 = vmatmul.mubr.bf16.gmra.mxu0 %v289
    %v376 = vpop.f32.mrf.mxu0
    %v377 = vadd.f32 %v257, %v376
    %v378 = vpop.f32.mrf.mxu0
    %v379 = vpop.f32.mrf.mxu0
    %v380 = vadd.f32 %v257, %v379
    %v381 = vpop.f32.mrf.mxu0
    %382 = vmatprep.mubr.bf16.mxu0 0
    %383 = vmatmul.mubr.bf16.gmra.mxu0 %v292
    %v384 = vpop.f32.mrf.mxu0
    %v385 = vadd.f32 %v257, %v384
    %v386 = vpop.f32.mrf.mxu0
    %v387 = vpop.f32.mrf.mxu0
    %v388 = vadd.f32 %v257, %v387
    %v389 = vpop.f32.mrf.mxu0
    %390 = vdwg.mxu0
    %v391 = vld [vmem:[%s1] sm:$0xff]
    %v392 = vld [vmem:[%s1 + $0x8] sm:$0xff]
    %v393 = vld [vmem:[%s1 + $0x10] sm:$0xff]
    %v394 = vld [vmem:[%s1 + $0x18] sm:$0xff]
    %v395 = vld [vmem:[%s1 + $0x20] sm:$0xff]
    %v396 = vld [vmem:[%s1 + $0x28] sm:$0xff]
    %v397 = vld [vmem:[%s1 + $0x30] sm:$0xff]
    %v398 = vld [vmem:[%s1 + $0x38] sm:$0xff]
    %v399 = vld [vmem:[%s1 + $0x40] sm:$0xff]
    %v400 = vld [vmem:[%s1 + $0x48] sm:$0xff]
    %v401 = vld [vmem:[%s1 + $0x50] sm:$0xff]
    %v402 = vld [vmem:[%s1 + $0x58] sm:$0xff]
    %v403 = vld [vmem:[%s1 + $0x60] sm:$0xff]
    %v404 = vld [vmem:[%s1 + $0x68] sm:$0xff]
    %v405 = vld [vmem:[%s1 + $0x70] sm:$0xff]
    %v406 = vld [vmem:[%s1 + $0x78] sm:$0xff]
    %vm407 = vcmp.gt.f32.partialorder %v391, 0.0
    %vm408 = vcmp.gt.f32.partialorder %v392, 0.0
    %vm409 = vcmp.gt.f32.partialorder %v393, 0.0
    %vm410 = vcmp.gt.f32.partialorder %v394, 0.0
    %vm411 = vcmp.gt.f32.partialorder %v395, 0.0
    %vm412 = vcmp.gt.f32.partialorder %v396, 0.0
    %vm413 = vcmp.gt.f32.partialorder %v397, 0.0
    %vm414 = vcmp.gt.f32.partialorder %v398, 0.0
    %vm415 = vcmp.gt.f32.partialorder %v399, 0.0
    %vm416 = vcmp.gt.f32.partialorder %v400, 0.0
    %vm417 = vcmp.gt.f32.partialorder %v401, 0.0
    %vm418 = vcmp.gt.f32.partialorder %v402, 0.0
    %vm419 = vcmp.gt.f32.partialorder %v403, 0.0
    %vm420 = vcmp.gt.f32.partialorder %v404, 0.0
    %vm421 = vcmp.gt.f32.partialorder %v405, 0.0
    %vm422 = vcmp.gt.f32.partialorder %v406, 0.0
    %v423 = vsel %vm407, 1, 0
    %v424 = vsel %vm408, 1, 0
    %v425 = vsel %vm409, 1, 0
    %v426 = vsel %vm410, 1, 0
    %v427 = vsel %vm411, 1, 0
    %v428 = vsel %vm412, 1, 0
    %v429 = vsel %vm413, 1, 0
    %v430 = vsel %vm414, 1, 0
    %v431 = vsel %vm415, 1, 0
    %v432 = vsel %vm416, 1, 0
    %v433 = vsel %vm417, 1, 0
    %v434 = vsel %vm418, 1, 0
    %v435 = vsel %vm419, 1, 0
    %v436 = vsel %vm420, 1, 0
    %v437 = vsel %vm421, 1, 0
    %v438 = vsel %vm422, 1, 0
    %439 = vset.pattern.permute.xlu0 0
    %440 = vperm.xlu0 %439, %v423
    %v441 = vpop.permute.xlu0 %440
    %442 = vset.pattern.permute.xlu0 0
    %443 = vperm.xlu0 %442, %v424
    %v444 = vpop.permute.xlu0 %443
    %445 = vset.pattern.permute.xlu0 0
    %446 = vperm.xlu0 %445, %v425
    %v447 = vpop.permute.xlu0 %446
    %448 = vset.pattern.permute.xlu0 0
    %449 = vperm.xlu0 %448, %v426
    %v450 = vpop.permute.xlu0 %449
    %451 = vset.pattern.permute.xlu0 0
    %452 = vperm.xlu0 %451, %v427
    %v453 = vpop.permute.xlu0 %452
    %454 = vset.pattern.permute.xlu0 0
    %455 = vperm.xlu0 %454, %v428
    %v456 = vpop.permute.xlu0 %455
    %457 = vset.pattern.permute.xlu0 0
    %458 = vperm.xlu0 %457, %v429
    %v459 = vpop.permute.xlu0 %458
    %460 = vset.pattern.permute.xlu0 0
    %461 = vperm.xlu0 %460, %v430
    %v462 = vpop.permute.xlu0 %461
    %463 = vset.pattern.permute.xlu0 0
    %464 = vperm.xlu0 %463, %v431
    %v465 = vpop.permute.xlu0 %464
    %466 = vset.pattern.permute.xlu0 0
    %467 = vperm.xlu0 %466, %v432
    %v468 = vpop.permute.xlu0 %467
    %469 = vset.pattern.permute.xlu0 0
    %470 = vperm.xlu0 %469, %v433
    %v471 = vpop.permute.xlu0 %470
    %472 = vset.pattern.permute.xlu0 0
    %473 = vperm.xlu0 %472, %v434
    %v474 = vpop.permute.xlu0 %473
    %475 = vset.pattern.permute.xlu0 0
    %476 = vperm.xlu0 %475, %v435
    %v477 = vpop.permute.xlu0 %476
    %478 = vset.pattern.permute.xlu0 0
    %479 = vperm.xlu0 %478, %v436
    %v480 = vpop.permute.xlu0 %479
    %481 = vset.pattern.permute.xlu0 0
    %482 = vperm.xlu0 %481, %v437
    %v483 = vpop.permute.xlu0 %482
    %484 = vset.pattern.permute.xlu0 0
    %485 = vperm.xlu0 %484, %v438
    %v486 = vpop.permute.xlu0 %485
    %vm487 = vcmp.eq.s32.totalorder %v441, 1
    %vm488 = vcmp.eq.s32.totalorder %v444, 1
    %vm489 = vcmp.eq.s32.totalorder %v447, 1
    %vm490 = vcmp.eq.s32.totalorder %v450, 1
    %vm491 = vcmp.eq.s32.totalorder %v453, 1
    %vm492 = vcmp.eq.s32.totalorder %v456, 1
    %vm493 = vcmp.eq.s32.totalorder %v459, 1
    %vm494 = vcmp.eq.s32.totalorder %v462, 1
    %vm495 = vcmp.eq.s32.totalorder %v465, 1
    %vm496 = vcmp.eq.s32.totalorder %v468, 1
    %vm497 = vcmp.eq.s32.totalorder %v471, 1
    %vm498 = vcmp.eq.s32.totalorder %v474, 1
    %vm499 = vcmp.eq.s32.totalorder %v477, 1
    %vm500 = vcmp.eq.s32.totalorder %v480, 1
    %vm501 = vcmp.eq.s32.totalorder %v483, 1
    %vm502 = vcmp.eq.s32.totalorder %v486, 1
    %v503 = vsel %vm487, -1e+09, %v329
    %v504 = vsel %vm488, -1e+09, %v332
    %v505 = vsel %vm489, -1e+09, %v337
    %v506 = vsel %vm490, -1e+09, %v340
    %v507 = vsel %vm491, -1e+09, %v345
    %v508 = vsel %vm492, -1e+09, %v348
    %v509 = vsel %vm493, -1e+09, %v353
    %v510 = vsel %vm494, -1e+09, %v356
    %v511 = vsel %vm495, -1e+09, %v361
    %v512 = vsel %vm496, -1e+09, %v364
    %v513 = vsel %vm497, -1e+09, %v369
    %v514 = vsel %vm498, -1e+09, %v372
    %v515 = vsel %vm499, -1e+09, %v377
    %v516 = vsel %vm500, -1e+09, %v380
    %v517 = vsel %vm501, -1e+09, %v385
    %v518 = vsel %vm502, -1e+09, %v388
    %vm519 = vcmask 15360
    %v520 = vsel %vm519, %v503, -inf
    %v521 = vsel %vm519, %v504, -inf
    %v522 = vmax.f32 %v520, %v521
    %v523 = vrot.slane %v522, 4
    %v524 = vmax.f32 %v522, %v523
    %v525 = vrot.slane %v524, 2
    %v526 = vmax.f32 %v524, %v525
    %v527 = vrot.slane %v526, 1
    %v528 = vmax.f32 %v526, %v527
    %v529 = vsel %vm519, %v505, -inf
    %v530 = vsel %vm519, %v506, -inf
    %v531 = vmax.f32 %v529, %v530
    %v532 = vrot.slane %v531, 4
    %v533 = vmax.f32 %v531, %v532
    %v534 = vrot.slane %v533, 2
    %v535 = vmax.f32 %v533, %v534
    %v536 = vrot.slane %v535, 1
    %v537 = vmax.f32 %v535, %v536
    %v538 = vsel %vm519, %v507, -inf
    %v539 = vsel %vm519, %v508, -inf
    %v540 = vmax.f32 %v538, %v539
    %v541 = vrot.slane %v540, 4
    %v542 = vmax.f32 %v540, %v541
    %v543 = vrot.slane %v542, 2
    %v544 = vmax.f32 %v542, %v543
    %v545 = vrot.slane %v544, 1
    %v546 = vmax.f32 %v544, %v545
    %v547 = vsel %vm519, %v509, -inf
    %v548 = vsel %vm519, %v510, -inf
    %v549 = vmax.f32 %v547, %v548
    %v550 = vrot.slane %v549, 4
    %v551 = vmax.f32 %v549, %v550
    %v552 = vrot.slane %v551, 2
    %v553 = vmax.f32 %v551, %v552
    %v554 = vrot.slane %v553, 1
    %v555 = vmax.f32 %v553, %v554
    %v556 = vsel %vm519, %v511, -inf
    %v557 = vsel %vm519, %v512, -inf
    %v558 = vmax.f32 %v556, %v557
    %v559 = vrot.slane %v558, 4
    %v560 = vmax.f32 %v558, %v559
    %v561 = vrot.slane %v560, 2
    %v562 = vmax.f32 %v560, %v561
    %v563 = vrot.slane %v562, 1
    %v564 = vmax.f32 %v562, %v563
    %v565 = vsel %vm519, %v513, -inf
    %v566 = vsel %vm519, %v514, -inf
    %v567 = vmax.f32 %v565, %v566
    %v568 = vrot.slane %v567, 4
    %v569 = vmax.f32 %v567, %v568
    %v570 = vrot.slane %v569, 2
    %v571 = vmax.f32 %v569, %v570
    %v572 = vrot.slane %v571, 1
    %v573 = vmax.f32 %v571, %v572
    %v574 = vsel %vm519, %v515, -inf
    %v575 = vsel %vm519, %v516, -inf
    %v576 = vmax.f32 %v574, %v575
    %v577 = vrot.slane %v576, 4
    %v578 = vmax.f32 %v576, %v577
    %v579 = vrot.slane %v578, 2
    %v580 = vmax.f32 %v578, %v579
    %v581 = vrot.slane %v580, 1
    %v582 = vmax.f32 %v580, %v581
    %v583 = vsel %vm519, %v517, -inf
    %v584 = vsel %vm519, %v518, -inf
    %v585 = vmax.f32 %v583, %v584
    %v586 = vrot.slane %v585, 4
    %v587 = vmax.f32 %v585, %v586
    %v588 = vrot.slane %v587, 2
    %v589 = vmax.f32 %v587, %v588
    %v590 = vrot.slane %v589, 1
    %v591 = vmax.f32 %v589, %v590
    %v592 = vsub.f32 %v503, %v528
    %v593 = vsub.f32 %v504, %v528
    %v594 = vsub.f32 %v505, %v537
    %v595 = vsub.f32 %v506, %v537
    %v596 = vsub.f32 %v507, %v546
    %v597 = vsub.f32 %v508, %v546
    %v598 = vsub.f32 %v509, %v555
    %v599 = vsub.f32 %v510, %v555
    %v600 = vsub.f32 %v511, %v564
    %v601 = vsub.f32 %v512, %v564
    %v602 = vsub.f32 %v513, %v573
    %v603 = vsub.f32 %v514, %v573
    %v604 = vsub.f32 %v515, %v582
    %v605 = vsub.f32 %v516, %v582
    %v606 = vsub.f32 %v517, %v591
    %v607 = vsub.f32 %v518, %v591
    %v608 = vmul.f32 %v592, 1.442695
    %v609 = vpow.pop %v608
    %v610 = vmul.f32 %v593, 1.442695
    %v611 = vpow.pop %v610
    %v612 = vmul.f32 %v594, 1.442695
    %v613 = vpow.pop %v612
    %v614 = vmul.f32 %v595, 1.442695
    %v615 = vpow.pop %v614
    %v616 = vmul.f32 %v596, 1.442695
    %v617 = vpow.pop %v616
    %v618 = vmul.f32 %v597, 1.442695
    %v619 = vpow.pop %v618
    %v620 = vmul.f32 %v598, 1.442695
    %v621 = vpow.pop %v620
    %v622 = vmul.f32 %v599, 1.442695
    %v623 = vpow.pop %v622
    %v624 = vmul.f32 %v600, 1.442695
    %v625 = vpow.pop %v624
    %v626 = vmul.f32 %v601, 1.442695
    %v627 = vpow.pop %v626
    %v628 = vmul.f32 %v602, 1.442695
    %v629 = vpow.pop %v628
    %v630 = vmul.f32 %v603, 1.442695
    %v631 = vpow.pop %v630
    %v632 = vmul.f32 %v604, 1.442695
    %v633 = vpow.pop %v632
    %v634 = vmul.f32 %v605, 1.442695
    %v635 = vpow.pop %v634
    %v636 = vmul.f32 %v606, 1.442695
    %v637 = vpow.pop %v636
    %v638 = vmul.f32 %v607, 1.442695
    %v639 = vpow.pop %v638
    %v640 = vsel %vm519, %v609, 0.0
    %v641 = vsel %vm519, %v611, 0.0
    %v642 = vadd.f32 %v640, %v641
    %v643 = vrot.slane %v642, 4
    %v644 = vadd.f32 %v642, %v643
    %v645 = vrot.slane %v644, 2
    %v646 = vadd.f32 %v644, %v645
    %v647 = vrot.slane %v646, 1
    %v648 = vadd.f32 %v646, %v647
    %v649 = vsel %vm519, %v613, 0.0
    %v650 = vsel %vm519, %v615, 0.0
    %v651 = vadd.f32 %v649, %v650
    %v652 = vrot.slane %v651, 4
    %v653 = vadd.f32 %v651, %v652
    %v654 = vrot.slane %v653, 2
    %v655 = vadd.f32 %v653, %v654
    %v656 = vrot.slane %v655, 1
    %v657 = vadd.f32 %v655, %v656
    %v658 = vsel %vm519, %v617, 0.0
    %v659 = vsel %vm519, %v619, 0.0
    %v660 = vadd.f32 %v658, %v659
    %v661 = vrot.slane %v660, 4
    %v662 = vadd.f32 %v660, %v661
    %v663 = vrot.slane %v662, 2
    %v664 = vadd.f32 %v662, %v663
    %v665 = vrot.slane %v664, 1
    %v666 = vadd.f32 %v664, %v665
    %v667 = vsel %vm519, %v621, 0.0
    %v668 = vsel %vm519, %v623, 0.0
    %v669 = vadd.f32 %v667, %v668
    %v670 = vrot.slane %v669, 4
    %v671 = vadd.f32 %v669, %v670
    %v672 = vrot.slane %v671, 2
    %v673 = vadd.f32 %v671, %v672
    %v674 = vrot.slane %v673, 1
    %v675 = vadd.f32 %v673, %v674
    %v676 = vsel %vm519, %v625, 0.0
    %v677 = vsel %vm519, %v627, 0.0
    %v678 = vadd.f32 %v676, %v677
    %v679 = vrot.slane %v678, 4
    %v680 = vadd.f32 %v678, %v679
    %v681 = vrot.slane %v680, 2
    %v682 = vadd.f32 %v680, %v681
    %v683 = vrot.slane %v682, 1
    %v684 = vadd.f32 %v682, %v683
    %v685 = vsel %vm519, %v629, 0.0
    %v686 = vsel %vm519, %v631, 0.0
    %v687 = vadd.f32 %v685, %v686
    %v688 = vrot.slane %v687, 4
    %v689 = vadd.f32 %v687, %v688
    %v690 = vrot.slane %v689, 2
    %v691 = vadd.f32 %v689, %v690
    %v692 = vrot.slane %v691, 1
    %v693 = vadd.f32 %v691, %v692
    %v694 = vsel %vm519, %v633, 0.0
    %v695 = vsel %vm519, %v635, 0.0
    %v696 = vadd.f32 %v694, %v695
    %v697 = vrot.slane %v696, 4
    %v698 = vadd.f32 %v696, %v697
    %v699 = vrot.slane %v698, 2
    %v700 = vadd.f32 %v698, %v699
    %v701 = vrot.slane %v700, 1
    %v702 = vadd.f32 %v700, %v701
    %v703 = vsel %vm519, %v637, 0.0
    %v704 = vsel %vm519, %v639, 0.0
    %v705 = vadd.f32 %v703, %v704
    %v706 = vrot.slane %v705, 4
    %v707 = vadd.f32 %v705, %v706
    %v708 = vrot.slane %v707, 2
    %v709 = vadd.f32 %v707, %v708
    %v710 = vrot.slane %v709, 1
    %v711 = vadd.f32 %v709, %v710
    %v712 = vrcp.pop %v648
    %v713 = vmul.f32 %v609, %v712
    %v714 = vmul.f32 %v611, %v712
    %v715 = vrcp.pop %v657
    %v716 = vmul.f32 %v613, %v715
    %v717 = vmul.f32 %v615, %v715
    %v718 = vrcp.pop %v666
    %v719 = vmul.f32 %v617, %v718
    %v720 = vmul.f32 %v619, %v718
    %v721 = vrcp.pop %v675
    %v722 = vmul.f32 %v621, %v721
    %v723 = vmul.f32 %v623, %v721
    %v724 = vrcp.pop %v684
    %v725 = vmul.f32 %v625, %v724
    %v726 = vmul.f32 %v627, %v724
    %v727 = vrcp.pop %v693
    %v728 = vmul.f32 %v629, %v727
    %v729 = vmul.f32 %v631, %v727
    %v730 = vrcp.pop %v702
    %v731 = vmul.f32 %v633, %v730
    %v732 = vmul.f32 %v635, %v730
    %v733 = vrcp.pop %v711
    %v734 = vmul.f32 %v637, %v733
    %v735 = vmul.f32 %v639, %v733
    %v736 = vpack.c.bf16 %v714, %v713
    %v737 = vpack.c.bf16 %v717, %v716
    %v738 = vpack.c.bf16 %v720, %v719
    %v739 = vpack.c.bf16 %v723, %v722
    %v740 = vpack.c.bf16 %v726, %v725
    %v741 = vpack.c.bf16 %v729, %v728
    %v742 = vpack.c.bf16 %v732, %v731
    %v743 = vpack.c.bf16 %v735, %v734
    %744 = vxpose.xlu0.c.b16.start [1/8] %v736, 128
    %745 = vxpose.xlu0.c.b16.cont [2/8] 0, 128
    %746 = vxpose.xlu0.c.b16.cont [3/8] 0, 128
    %747 = vxpose.xlu0.c.b16.cont [4/8] 0, 128
    %748 = vxpose.xlu0.c.b16.cont [5/8] 0, 128
    %749 = vxpose.xlu0.c.b16.cont [6/8] 0, 128
    %750 = vxpose.xlu0.c.b16.cont [7/8] 0, 128
    %751 = vxpose.xlu0.c.b16.end [8/8] 0, 128
    %v752 = vpop.trf.xlu0
    %v753 = vpop.trf.xlu0
    %v754 = vpop.trf.xlu0
    %v755 = vpop.trf.xlu0
    %v756 = vpop.trf.xlu0
    %v757 = vpop.trf.xlu0
    %v758 = vpop.trf.xlu0
    %v759 = vpop.trf.xlu0
    %vm761 = vcmask 130048
    %v763 = vsel %vm761, %v752, 0
    %765 = vmatprep.subr.bf16.mxu0 0
    %766 = vmatpush1.bf16.msra.mxu0 0
    %767 = vmatprep.subr.bf16.mxu0 0
    %768 = vmatpush1.bf16.msra.mxu0 0
    %769 = vmatprep.subr.bf16.mxu0 0
    %770 = vmatpush1.bf16.msra.mxu0 0
    %771 = vmatprep.subr.bf16.mxu0 0
    %772 = vmatpush1.bf16.msra.mxu0 0
    %773 = vmatprep.subr.bf16.mxu0 0
    %774 = vmatpush1.bf16.msra.mxu0 0
    %775 = vmatprep.subr.bf16.mxu0 0
    %776 = vmatpush1.bf16.msra.mxu0 0
    %777 = vmatprep.subr.bf16.mxu0 0
    %778 = vmatpush1.bf16.msra.mxu0 0
    %779 = vmatprep.subr.bf16.mxu0 0
    %780 = vmatpush1.bf16.msra.mxu0 %v84
    %781 = vmatprep.subr.bf16.mxu0 0
    %782 = vmatpush2.bf16.msra.mxu0 0
    %783 = vmatprep.subr.bf16.mxu0 0
    %784 = vmatpush2.bf16.msra.mxu0 0
    %785 = vmatprep.subr.bf16.mxu0 0
    %786 = vmatpush2.bf16.msra.mxu0 0
    %787 = vmatprep.subr.bf16.mxu0 0
    %788 = vmatpush2.bf16.msra.mxu0 0
    %789 = vmatprep.subr.bf16.mxu0 0
    %790 = vmatpush2.bf16.msra.mxu0 0
    %791 = vmatprep.subr.bf16.mxu0 0
    %792 = vmatpush2.bf16.msra.mxu0 0
    %793 = vmatprep.subr.bf16.mxu0 0
    %794 = vmatpush2.bf16.msra.mxu0 0
    %795 = vmatprep.subr.bf16.mxu0 0
    %796 = vmatpush2.bf16.msra.mxu0 0
    %797 = vmatprep.mubr.bf16.mxu0 0
    %798 = vmatmul.mubr.bf16.gmra.mxu0 %v763
    %v799 = vpop.f32.mrf.mxu0
    %v800 = vadd.f32 0.0, %v799
    %v801 = vpop.f32.mrf.mxu0
    %v802 = vpop.f32.mrf.mxu0
    %v803 = vpop.f32.mrf.mxu0
    %804 = vdwg.mxu0
    %805 = vxpose.xlu0.c.b16.start [1/8] %v737, 128
    %806 = vxpose.xlu0.c.b16.cont [2/8] 0, 128
    %807 = vxpose.xlu0.c.b16.cont [3/8] 0, 128
    %808 = vxpose.xlu0.c.b16.cont [4/8] 0, 128
    %809 = vxpose.xlu0.c.b16.cont [5/8] 0, 128
    %810 = vxpose.xlu0.c.b16.cont [6/8] 0, 128
    %811 = vxpose.xlu0.c.b16.cont [7/8] 0, 128
    %812 = vxpose.xlu0.c.b16.end [8/8] 0, 128
    %v813 = vpop.trf.xlu0
    %v814 = vpop.trf.xlu0
    %v815 = vpop.trf.xlu0
    %v816 = vpop.trf.xlu0
    %v817 = vpop.trf.xlu0
    %v818 = vpop.trf.xlu0
    %v819 = vpop.trf.xlu0
    %v820 = vpop.trf.xlu0
    %v823 = vsel %vm761, %v813, 0
    %825 = vmatprep.subr.bf16.mxu0 0
    %826 = vmatpush1.bf16.msra.mxu0 0
    %827 = vmatprep.subr.bf16.mxu0 0
    %828 = vmatpush1.bf16.msra.mxu0 0
    %829 = vmatprep.subr.bf16.mxu0 0
    %830 = vmatpush1.bf16.msra.mxu0 0
    %831 = vmatprep.subr.bf16.mxu0 0
    %832 = vmatpush1.bf16.msra.mxu0 0
    %833 = vmatprep.subr.bf16.mxu0 0
    %834 = vmatpush1.bf16.msra.mxu0 0
    %835 = vmatprep.subr.bf16.mxu0 0
    %836 = vmatpush1.bf16.msra.mxu0 0
    %837 = vmatprep.subr.bf16.mxu0 0
    %838 = vmatpush1.bf16.msra.mxu0 0
    %839 = vmatprep.subr.bf16.mxu0 0
    %840 = vmatpush1.bf16.msra.mxu0 %v85
    %841 = vmatprep.subr.bf16.mxu0 0
    %842 = vmatpush2.bf16.msra.mxu0 0
    %843 = vmatprep.subr.bf16.mxu0 0
    %844 = vmatpush2.bf16.msra.mxu0 0
    %845 = vmatprep.subr.bf16.mxu0 0
    %846 = vmatpush2.bf16.msra.mxu0 0
    %847 = vmatprep.subr.bf16.mxu0 0
    %848 = vmatpush2.bf16.msra.mxu0 0
    %849 = vmatprep.subr.bf16.mxu0 0
    %850 = vmatpush2.bf16.msra.mxu0 0
    %851 = vmatprep.subr.bf16.mxu0 0
    %852 = vmatpush2.bf16.msra.mxu0 0
    %853 = vmatprep.subr.bf16.mxu0 0
    %854 = vmatpush2.bf16.msra.mxu0 0
    %855 = vmatprep.subr.bf16.mxu0 0
    %856 = vmatpush2.bf16.msra.mxu0 0
    %857 = vmatprep.mubr.bf16.mxu0 0
    %858 = vmatmul.mubr.bf16.gmra.mxu0 %v823
    %v859 = vpop.f32.mrf.mxu0
    %v860 = vadd.f32 0.0, %v859
    %v861 = vpop.f32.mrf.mxu0
    %v862 = vpop.f32.mrf.mxu0
    %v863 = vpop.f32.mrf.mxu0
    %864 = vdwg.mxu0
    %865 = vxpose.xlu0.c.b16.start [1/8] %v738, 128
    %866 = vxpose.xlu0.c.b16.cont [2/8] 0, 128
    %867 = vxpose.xlu0.c.b16.cont [3/8] 0, 128
    %868 = vxpose.xlu0.c.b16.cont [4/8] 0, 128
    %869 = vxpose.xlu0.c.b16.cont [5/8] 0, 128
    %870 = vxpose.xlu0.c.b16.cont [6/8] 0, 128
    %871 = vxpose.xlu0.c.b16.cont [7/8] 0, 128
    %872 = vxpose.xlu0.c.b16.end [8/8] 0, 128
    %v873 = vpop.trf.xlu0
    %v874 = vpop.trf.xlu0
    %v875 = vpop.trf.xlu0
    %v876 = vpop.trf.xlu0
    %v877 = vpop.trf.xlu0
    %v878 = vpop.trf.xlu0
    %v879 = vpop.trf.xlu0
    %v880 = vpop.trf.xlu0
    %v883 = vsel %vm761, %v873, 0
    %885 = vmatprep.subr.bf16.mxu0 0
    %886 = vmatpush1.bf16.msra.mxu0 0
    %887 = vmatprep.subr.bf16.mxu0 0
    %888 = vmatpush1.bf16.msra.mxu0 0
    %889 = vmatprep.subr.bf16.mxu0 0
    %890 = vmatpush1.bf16.msra.mxu0 0
    %891 = vmatprep.subr.bf16.mxu0 0
    %892 = vmatpush1.bf16.msra.mxu0 0
    %893 = vmatprep.subr.bf16.mxu0 0
    %894 = vmatpush1.bf16.msra.mxu0 0
    %895 = vmatprep.subr.bf16.mxu0 0
    %896 = vmatpush1.bf16.msra.mxu0 0
    %897 = vmatprep.subr.bf16.mxu0 0
    %898 = vmatpush1.bf16.msra.mxu0 0
    %899 = vmatprep.subr.bf16.mxu0 0
    %900 = vmatpush1.bf16.msra.mxu0 %v86
    %901 = vmatprep.subr.bf16.mxu0 0
    %902 = vmatpush2.bf16.msra.mxu0 0
    %903 = vmatprep.subr.bf16.mxu0 0
    %904 = vmatpush2.bf16.msra.mxu0 0
    %905 = vmatprep.subr.bf16.mxu0 0
    %906 = vmatpush2.bf16.msra.mxu0 0
    %907 = vmatprep.subr.bf16.mxu0 0
    %908 = vmatpush2.bf16.msra.mxu0 0
    %909 = vmatprep.subr.bf16.mxu0 0
    %910 = vmatpush2.bf16.msra.mxu0 0
    %911 = vmatprep.subr.bf16.mxu0 0
    %912 = vmatpush2.bf16.msra.mxu0 0
    %913 = vmatprep.subr.bf16.mxu0 0
    %914 = vmatpush2.bf16.msra.mxu0 0
    %915 = vmatprep.subr.bf16.mxu0 0
    %916 = vmatpush2.bf16.msra.mxu0 0
    %917 = vmatprep.mubr.bf16.mxu0 0
    %918 = vmatmul.mubr.bf16.gmra.mxu0 %v883
    %v919 = vpop.f32.mrf.mxu0
    %v920 = vadd.f32 0.0, %v919
    %v921 = vpop.f32.mrf.mxu0
    %v922 = vpop.f32.mrf.mxu0
    %v923 = vpop.f32.mrf.mxu0
    %924 = vdwg.mxu0
    %925 = vxpose.xlu0.c.b16.start [1/8] %v739, 128
    %926 = vxpose.xlu0.c.b16.cont [2/8] 0, 128
    %927 = vxpose.xlu0.c.b16.cont [3/8] 0, 128
    %928 = vxpose.xlu0.c.b16.cont [4/8] 0, 128
    %929 = vxpose.xlu0.c.b16.cont [5/8] 0, 128
    %930 = vxpose.xlu0.c.b16.cont [6/8] 0, 128
    %931 = vxpose.xlu0.c.b16.cont [7/8] 0, 128
    %932 = vxpose.xlu0.c.b16.end [8/8] 0, 128
    %v933 = vpop.trf.xlu0
    %v934 = vpop.trf.xlu0
    %v935 = vpop.trf.xlu0
    %v936 = vpop.trf.xlu0
    %v937 = vpop.trf.xlu0
    %v938 = vpop.trf.xlu0
    %v939 = vpop.trf.xlu0
    %v940 = vpop.trf.xlu0
    %v943 = vsel %vm761, %v933, 0
    %945 = vmatprep.subr.bf16.mxu0 0
    %946 = vmatpush1.bf16.msra.mxu0 0
    %947 = vmatprep.subr.bf16.mxu0 0
    %948 = vmatpush1.bf16.msra.mxu0 0
    %949 = vmatprep.subr.bf16.mxu0 0
    %950 = vmatpush1.bf16.msra.mxu0 0
    %951 = vmatprep.subr.bf16.mxu0 0
    %952 = vmatpush1.bf16.msra.mxu0 0
    %953 = vmatprep.subr.bf16.mxu0 0
    %954 = vmatpush1.bf16.msra.mxu0 0
    %955 = vmatprep.subr.bf16.mxu0 0
    %956 = vmatpush1.bf16.msra.mxu0 0
    %957 = vmatprep.subr.bf16.mxu0 0
    %958 = vmatpush1.bf16.msra.mxu0 0
    %959 = vmatprep.subr.bf16.mxu0 0
    %960 = vmatpush1.bf16.msra.mxu0 %v87
    %961 = vmatprep.subr.bf16.mxu0 0
    %962 = vmatpush2.bf16.msra.mxu0 0
    %963 = vmatprep.subr.bf16.mxu0 0
    %964 = vmatpush2.bf16.msra.mxu0 0
    %965 = vmatprep.subr.bf16.mxu0 0
    %966 = vmatpush2.bf16.msra.mxu0 0
    %967 = vmatprep.subr.bf16.mxu0 0
    %968 = vmatpush2.bf16.msra.mxu0 0
    %969 = vmatprep.subr.bf16.mxu0 0
    %970 = vmatpush2.bf16.msra.mxu0 0
    %971 = vmatprep.subr.bf16.mxu0 0
    %972 = vmatpush2.bf16.msra.mxu0 0
    %973 = vmatprep.subr.bf16.mxu0 0
    %974 = vmatpush2.bf16.msra.mxu0 0
    %975 = vmatprep.subr.bf16.mxu0 0
    %976 = vmatpush2.bf16.msra.mxu0 0
    %977 = vmatprep.mubr.bf16.mxu0 0
    %978 = vmatmul.mubr.bf16.gmra.mxu0 %v943
    %v979 = vpop.f32.mrf.mxu0
    %v980 = vadd.f32 0.0, %v979
    %v981 = vpop.f32.mrf.mxu0
    %v982 = vpop.f32.mrf.mxu0
    %v983 = vpop.f32.mrf.mxu0
    %984 = vdwg.mxu0
    %985 = vxpose.xlu0.c.b16.start [1/8] %v740, 128
    %986 = vxpose.xlu0.c.b16.cont [2/8] 0, 128
    %987 = vxpose.xlu0.c.b16.cont [3/8] 0, 128
    %988 = vxpose.xlu0.c.b16.cont [4/8] 0, 128
    %989 = vxpose.xlu0.c.b16.cont [5/8] 0, 128
    %990 = vxpose.xlu0.c.b16.cont [6/8] 0, 128
    %991 = vxpose.xlu0.c.b16.cont [7/8] 0, 128
    %992 = vxpose.xlu0.c.b16.end [8/8] 0, 128
    %v993 = vpop.trf.xlu0
    %v994 = vpop.trf.xlu0
    %v995 = vpop.trf.xlu0
    %v996 = vpop.trf.xlu0
    %v997 = vpop.trf.xlu0
    %v998 = vpop.trf.xlu0
    %v999 = vpop.trf.xlu0
    %v1000 = vpop.trf.xlu0
    %v1003 = vsel %vm761, %v993, 0
    %1005 = vmatprep.subr.bf16.mxu0 0
    %1006 = vmatpush1.bf16.msra.mxu0 0
    %1007 = vmatprep.subr.bf16.mxu0 0
    %1008 = vmatpush1.bf16.msra.mxu0 0
    %1009 = vmatprep.subr.bf16.mxu0 0
    %1010 = vmatpush1.bf16.msra.mxu0 0
    %1011 = vmatprep.subr.bf16.mxu0 0
    %1012 = vmatpush1.bf16.msra.mxu0 0
    %1013 = vmatprep.subr.bf16.mxu0 0
    %1014 = vmatpush1.bf16.msra.mxu0 0
    %1015 = vmatprep.subr.bf16.mxu0 0
    %1016 = vmatpush1.bf16.msra.mxu0 0
    %1017 = vmatprep.subr.bf16.mxu0 0
    %1018 = vmatpush1.bf16.msra.mxu0 0
    %1019 = vmatprep.subr.bf16.mxu0 0
    %1020 = vmatpush1.bf16.msra.mxu0 %v88
    %1021 = vmatprep.subr.bf16.mxu0 0
    %1022 = vmatpush2.bf16.msra.mxu0 0
    %1023 = vmatprep.subr.bf16.mxu0 0
    %1024 = vmatpush2.bf16.msra.mxu0 0
    %1025 = vmatprep.subr.bf16.mxu0 0
    %1026 = vmatpush2.bf16.msra.mxu0 0
    %1027 = vmatprep.subr.bf16.mxu0 0
    %1028 = vmatpush2.bf16.msra.mxu0 0
    %1029 = vmatprep.subr.bf16.mxu0 0
    %1030 = vmatpush2.bf16.msra.mxu0 0
    %1031 = vmatprep.subr.bf16.mxu0 0
    %1032 = vmatpush2.bf16.msra.mxu0 0
    %1033 = vmatprep.subr.bf16.mxu0 0
    %1034 = vmatpush2.bf16.msra.mxu0 0
    %1035 = vmatprep.subr.bf16.mxu0 0
    %1036 = vmatpush2.bf16.msra.mxu0 0
    %1037 = vmatprep.mubr.bf16.mxu0 0
    %1038 = vmatmul.mubr.bf16.gmra.mxu0 %v1003
    %v1039 = vpop.f32.mrf.mxu0
    %v1040 = vadd.f32 0.0, %v1039
    %v1041 = vpop.f32.mrf.mxu0
    %v1042 = vpop.f32.mrf.mxu0
    %v1043 = vpop.f32.mrf.mxu0
    %1044 = vdwg.mxu0
    %1045 = vxpose.xlu0.c.b16.start [1/8] %v741, 128
    %1046 = vxpose.xlu0.c.b16.cont [2/8] 0, 128
    %1047 = vxpose.xlu0.c.b16.cont [3/8] 0, 128
    %1048 = vxpose.xlu0.c.b16.cont [4/8] 0, 128
    %1049 = vxpose.xlu0.c.b16.cont [5/8] 0, 128
    %1050 = vxpose.xlu0.c.b16.cont [6/8] 0, 128
    %1051 = vxpose.xlu0.c.b16.cont [7/8] 0, 128
    %1052 = vxpose.xlu0.c.b16.end [8/8] 0, 128
    %v1053 = vpop.trf.xlu0
    %v1054 = vpop.trf.xlu0
    %v1055 = vpop.trf.xlu0
    %v1056 = vpop.trf.xlu0
    %v1057 = vpop.trf.xlu0
    %v1058 = vpop.trf.xlu0
    %v1059 = vpop.trf.xlu0
    %v1060 = vpop.trf.xlu0
    %v1063 = vsel %vm761, %v1053, 0
    %1065 = vmatprep.subr.bf16.mxu0 0
    %1066 = vmatpush1.bf16.msra.mxu0 0
    %1067 = vmatprep.subr.bf16.mxu0 0
    %1068 = vmatpush1.bf16.msra.mxu0 0
    %1069 = vmatprep.subr.bf16.mxu0 0
    %1070 = vmatpush1.bf16.msra.mxu0 0
    %1071 = vmatprep.subr.bf16.mxu0 0
    %1072 = vmatpush1.bf16.msra.mxu0 0
    %1073 = vmatprep.subr.bf16.mxu0 0
    %1074 = vmatpush1.bf16.msra.mxu0 0
    %1075 = vmatprep.subr.bf16.mxu0 0
    %1076 = vmatpush1.bf16.msra.mxu0 0
    %1077 = vmatprep.subr.bf16.mxu0 0
    %1078 = vmatpush1.bf16.msra.mxu0 0
    %1079 = vmatprep.subr.bf16.mxu0 0
    %1080 = vmatpush1.bf16.msra.mxu0 %v89
    %1081 = vmatprep.subr.bf16.mxu0 0
    %1082 = vmatpush2.bf16.msra.mxu0 0
    %1083 = vmatprep.subr.bf16.mxu0 0
    %1084 = vmatpush2.bf16.msra.mxu0 0
    %1085 = vmatprep.subr.bf16.mxu0 0
    %1086 = vmatpush2.bf16.msra.mxu0 0
    %1087 = vmatprep.subr.bf16.mxu0 0
    %1088 = vmatpush2.bf16.msra.mxu0 0
    %1089 = vmatprep.subr.bf16.mxu0 0
    %1090 = vmatpush2.bf16.msra.mxu0 0
    %1091 = vmatprep.subr.bf16.mxu0 0
    %1092 = vmatpush2.bf16.msra.mxu0 0
    %1093 = vmatprep.subr.bf16.mxu0 0
    %1094 = vmatpush2.bf16.msra.mxu0 0
    %1095 = vmatprep.subr.bf16.mxu0 0
    %1096 = vmatpush2.bf16.msra.mxu0 0
    %1097 = vmatprep.mubr.bf16.mxu0 0
    %1098 = vmatmul.mubr.bf16.gmra.mxu0 %v1063
    %v1099 = vpop.f32.mrf.mxu0
    %v1100 = vadd.f32 0.0, %v1099
    %v1101 = vpop.f32.mrf.mxu0
    %v1102 = vpop.f32.mrf.mxu0
    %v1103 = vpop.f32.mrf.mxu0
    %1104 = vdwg.mxu0
    %1105 = vxpose.xlu0.c.b16.start [1/8] %v742, 128
    %1106 = vxpose.xlu0.c.b16.cont [2/8] 0, 128
    %1107 = vxpose.xlu0.c.b16.cont [3/8] 0, 128
    %1108 = vxpose.xlu0.c.b16.cont [4/8] 0, 128
    %1109 = vxpose.xlu0.c.b16.cont [5/8] 0, 128
    %1110 = vxpose.xlu0.c.b16.cont [6/8] 0, 128
    %1111 = vxpose.xlu0.c.b16.cont [7/8] 0, 128
    %1112 = vxpose.xlu0.c.b16.end [8/8] 0, 128
    %v1113 = vpop.trf.xlu0
    %v1114 = vpop.trf.xlu0
    %v1115 = vpop.trf.xlu0
    %v1116 = vpop.trf.xlu0
    %v1117 = vpop.trf.xlu0
    %v1118 = vpop.trf.xlu0
    %v1119 = vpop.trf.xlu0
    %v1120 = vpop.trf.xlu0
    %v1123 = vsel %vm761, %v1113, 0
    %1125 = vmatprep.subr.bf16.mxu0 0
    %1126 = vmatpush1.bf16.msra.mxu0 0
    %1127 = vmatprep.subr.bf16.mxu0 0
    %1128 = vmatpush1.bf16.msra.mxu0 0
    %1129 = vmatprep.subr.bf16.mxu0 0
    %1130 = vmatpush1.bf16.msra.mxu0 0
    %1131 = vmatprep.subr.bf16.mxu0 0
    %1132 = vmatpush1.bf16.msra.mxu0 0
    %1133 = vmatprep.subr.bf16.mxu0 0
    %1134 = vmatpush1.bf16.msra.mxu0 0
    %1135 = vmatprep.subr.bf16.mxu0 0
    %1136 = vmatpush1.bf16.msra.mxu0 0
    %1137 = vmatprep.subr.bf16.mxu0 0
    %1138 = vmatpush1.bf16.msra.mxu0 0
    %1139 = vmatprep.subr.bf16.mxu0 0
    %1140 = vmatpush1.bf16.msra.mxu0 %v90
    %1141 = vmatprep.subr.bf16.mxu0 0
    %1142 = vmatpush2.bf16.msra.mxu0 0
    %1143 = vmatprep.subr.bf16.mxu0 0
    %1144 = vmatpush2.bf16.msra.mxu0 0
    %1145 = vmatprep.subr.bf16.mxu0 0
    %1146 = vmatpush2.bf16.msra.mxu0 0
    %1147 = vmatprep.subr.bf16.mxu0 0
    %1148 = vmatpush2.bf16.msra.mxu0 0
    %1149 = vmatprep.subr.bf16.mxu0 0
    %1150 = vmatpush2.bf16.msra.mxu0 0
    %1151 = vmatprep.subr.bf16.mxu0 0
    %1152 = vmatpush2.bf16.msra.mxu0 0
    %1153 = vmatprep.subr.bf16.mxu0 0
    %1154 = vmatpush2.bf16.msra.mxu0 0
    %1155 = vmatprep.subr.bf16.mxu0 0
    %1156 = vmatpush2.bf16.msra.mxu0 0
    %1157 = vmatprep.mubr.bf16.mxu0 0
    %1158 = vmatmul.mubr.bf16.gmra.mxu0 %v1123
    %v1159 = vpop.f32.mrf.mxu0
    %v1160 = vadd.f32 0.0, %v1159
    %v1161 = vpop.f32.mrf.mxu0
    %v1162 = vpop.f32.mrf.mxu0
    %v1163 = vpop.f32.mrf.mxu0
    %1164 = vdwg.mxu0
    %1165 = vxpose.xlu0.c.b16.start [1/8] %v743, 128
    %1166 = vxpose.xlu0.c.b16.cont [2/8] 0, 128
    %1167 = vxpose.xlu0.c.b16.cont [3/8] 0, 128
    %1168 = vxpose.xlu0.c.b16.cont [4/8] 0, 128
    %1169 = vxpose.xlu0.c.b16.cont [5/8] 0, 128
    %1170 = vxpose.xlu0.c.b16.cont [6/8] 0, 128
    %1171 = vxpose.xlu0.c.b16.cont [7/8] 0, 128
    %1172 = vxpose.xlu0.c.b16.end [8/8] 0, 128
    %v1173 = vpop.trf.xlu0
    %v1174 = vpop.trf.xlu0
    %v1175 = vpop.trf.xlu0
    %v1176 = vpop.trf.xlu0
    %v1177 = vpop.trf.xlu0
    %v1178 = vpop.trf.xlu0
    %v1179 = vpop.trf.xlu0
    %v1180 = vpop.trf.xlu0
    %v1183 = vsel %vm761, %v1173, 0
    %1185 = vmatprep.subr.bf16.mxu0 0
    %1186 = vmatpush1.bf16.msra.mxu0 0
    %1187 = vmatprep.subr.bf16.mxu0 0
    %1188 = vmatpush1.bf16.msra.mxu0 0
    %1189 = vmatprep.subr.bf16.mxu0 0
    %1190 = vmatpush1.bf16.msra.mxu0 0
    %1191 = vmatprep.subr.bf16.mxu0 0
    %1192 = vmatpush1.bf16.msra.mxu0 0
    %1193 = vmatprep.subr.bf16.mxu0 0
    %1194 = vmatpush1.bf16.msra.mxu0 0
    %1195 = vmatprep.subr.bf16.mxu0 0
    %1196 = vmatpush1.bf16.msra.mxu0 0
    %1197 = vmatprep.subr.bf16.mxu0 0
    %1198 = vmatpush1.bf16.msra.mxu0 0
    %1199 = vmatprep.subr.bf16.mxu0 0
    %1200 = vmatpush1.bf16.msra.mxu0 %v91
    %1201 = vmatprep.subr.bf16.mxu0 0
    %1202 = vmatpush2.bf16.msra.mxu0 0
    %1203 = vmatprep.subr.bf16.mxu0 0
    %1204 = vmatpush2.bf16.msra.mxu0 0
    %1205 = vmatprep.subr.bf16.mxu0 0
    %1206 = vmatpush2.bf16.msra.mxu0 0
    %1207 = vmatprep.subr.bf16.mxu0 0
    %1208 = vmatpush2.bf16.msra.mxu0 0
    %1209 = vmatprep.subr.bf16.mxu0 0
    %1210 = vmatpush2.bf16.msra.mxu0 0
    %1211 = vmatprep.subr.bf16.mxu0 0
    %1212 = vmatpush2.bf16.msra.mxu0 0
    %1213 = vmatprep.subr.bf16.mxu0 0
    %1214 = vmatpush2.bf16.msra.mxu0 0
    %1215 = vmatprep.subr.bf16.mxu0 0
    %1216 = vmatpush2.bf16.msra.mxu0 0
    %1217 = vmatprep.mubr.bf16.mxu0 0
    %1218 = vmatmul.mubr.bf16.gmra.mxu0 %v1183
    %v1219 = vpop.f32.mrf.mxu0
    %v1220 = vadd.f32 0.0, %v1219
    %v1221 = vpop.f32.mrf.mxu0
    %v1222 = vpop.f32.mrf.mxu0
    %v1223 = vpop.f32.mrf.mxu0
    %1224 = vdwg.mxu0
    %v1225 = vpack.c.bf16 %v800, %v800
    %v1226 = vpack.c.bf16 %v860, %v860
    %v1227 = vpack.c.bf16 %v920, %v920
    %v1228 = vpack.c.bf16 %v980, %v980
    %v1229 = vpack.c.bf16 %v1040, %v1040
    %v1230 = vpack.c.bf16 %v1100, %v1100
    %v1231 = vpack.c.bf16 %v1160, %v1160
    %v1232 = vpack.c.bf16 %v1220, %v1220
    %v1233 = vld [vmem:[%s4] sm:$0xf]
    %v1234 = vld [vmem:[%s4 + $0x4] sm:$0xf]
    %v1235 = vld [vmem:[%s4 + $0x8] sm:$0xf]
    %v1236 = vld [vmem:[%s4 + $0xc] sm:$0xf]
    %v1245 = vunpack.c.l.b16 %v1225
    %v1246 = vunpack.c.l.b16 %v1226
    %v1247 = vunpack.c.l.b16 %v1227
    %v1248 = vunpack.c.l.b16 %v1228
    %v1249 = vunpack.c.l.b16 %v1229
    %v1250 = vunpack.c.l.b16 %v1230
    %v1251 = vunpack.c.l.b16 %v1231
    %v1252 = vunpack.c.l.b16 %v1232
    %v1253 = vrot.slane %v1246, 7
    %vm1254 = vcmask 1041409
    %v1255 = vsel %vm1254, %v1253, %v1245
    %v1256 = vrot.slane %v1247, 6
    %vm1257 = vcmask 1042434
    %v1258 = vsel %vm1257, %v1256, %v1255
    %v1259 = vrot.slane %v1248, 5
    %vm1260 = vcmask 1043459
    %v1261 = vsel %vm1260, %v1259, %v1258
    %v1262 = vrot.slane %v1249, 4
    %vm1263 = vcmask 1044484
    %v1264 = vsel %vm1263, %v1262, %v1261
    %v1265 = vrot.slane %v1250, 3
    %vm1266 = vcmask 1045509
    %v1267 = vsel %vm1266, %v1265, %v1264
    %v1268 = vrot.slane %v1251, 2
    %vm1269 = vcmask 1046534
    %v1270 = vsel %vm1269, %v1268, %v1267
    %v1271 = vrot.slane %v1252, 1
    %vm1272 = vcmask 1047559
    %v1273 = vsel %vm1272, %v1271, %v1270
    %v1274 = vpack.c.b16 %v1273, %v1273
    %v1279 = vunpack.c.l.b16 %v1233
    %v1280 = vunpack.c.l.b16 %v1234
    %v1281 = vunpack.c.l.b16 %v1235
    %v1282 = vunpack.c.l.b16 %v1236
    %v1283 = vpack.c.b16 %v1280, %v1279
    %v1284 = vpack.c.b16 %v1282, %v1281
    %v1288 = vsel %vm104, %v1274, 0
    %1290 = vmatprep.subr.bf16.mxu0 0
    %1291 = vmatpush1.bf16.msra.mxu0 0
    %1292 = vmatprep.subr.bf16.mxu0 0
    %1293 = vmatpush1.bf16.msra.mxu0 0
    %1294 = vmatprep.subr.bf16.mxu0 0
    %1295 = vmatpush1.bf16.msra.mxu0 0
    %1296 = vmatprep.subr.bf16.mxu0 0
    %1297 = vmatpush1.bf16.msra.mxu0 0
    %1298 = vmatprep.subr.bf16.mxu0 0
    %1299 = vmatpush1.bf16.msra.mxu0 0
    %1300 = vmatprep.subr.bf16.mxu0 0
    %1301 = vmatpush1.bf16.msra.mxu0 0
    %1302 = vmatprep.subr.bf16.mxu0 0
    %1303 = vmatpush1.bf16.msra.mxu0 %v1284
    %1304 = vmatprep.subr.bf16.mxu0 0
    %1305 = vmatpush1.bf16.msra.mxu0 %v1283
    %1306 = vmatprep.subr.bf16.mxu0 0
    %1307 = vmatpush2.bf16.msra.mxu0 0
    %1308 = vmatprep.subr.bf16.mxu0 0
    %1309 = vmatpush2.bf16.msra.mxu0 0
    %1310 = vmatprep.subr.bf16.mxu0 0
    %1311 = vmatpush2.bf16.msra.mxu0 0
    %1312 = vmatprep.subr.bf16.mxu0 0
    %1313 = vmatpush2.bf16.msra.mxu0 0
    %1314 = vmatprep.subr.bf16.mxu0 0
    %1315 = vmatpush2.bf16.msra.mxu0 0
    %1316 = vmatprep.subr.bf16.mxu0 0
    %1317 = vmatpush2.bf16.msra.mxu0 0
    %1318 = vmatprep.subr.bf16.mxu0 0
    %1319 = vmatpush2.bf16.msra.mxu0 0
    %1320 = vmatprep.subr.bf16.mxu0 0
    %1321 = vmatpush2.bf16.msra.mxu0 0
    %1322 = vmatprep.mubr.bf16.mxu0 0
    %1323 = vmatmul.mubr.bf16.gmra.mxu0 %v1288
    %v1324 = vpop.f32.mrf.mxu0
    %v1325 = vadd.f32 0.0, %v1324
    %v1326 = vpop.f32.mrf.mxu0
    %v1327 = vpop.f32.mrf.mxu0
    %v1328 = vpop.f32.mrf.mxu0
    %1329 = vdwg.mxu0
    %v1330 = vlaneseq
    %v1331 = vshrl.u32 %v1330, 7
    %v1332 = vsub.s32 0, %v1331
    %v1333 = vrot.slane %v43, %v1332
    %v1334 = vadd.f32 %v1333, %v1325
    %s1335 = scalar_lea.vmem %s4, 16
    %v1336 = vld [vmem:[%s1335] sm:$0xf]
    %v1337 = vld [vmem:[%s1335 + $0x4] sm:$0xf]
    %v1338 = vld [vmem:[%s1335 + $0x8] sm:$0xf]
    %v1339 = vld [vmem:[%s1335 + $0xc] sm:$0xf]
    %v1340 = vrot.slane %v1245, 1
    %v1341 = vsel %vm1254, %v1246, %v1340
    %v1342 = vrot.slane %v1247, 7
    %v1343 = vsel %vm1257, %v1342, %v1341
    %v1344 = vrot.slane %v1248, 6
    %v1345 = vsel %vm1260, %v1344, %v1343
    %v1346 = vrot.slane %v1249, 5
    %v1347 = vsel %vm1263, %v1346, %v1345
    %v1348 = vrot.slane %v1250, 4
    %v1349 = vsel %vm1266, %v1348, %v1347
    %v1350 = vrot.slane %v1251, 3
    %v1351 = vsel %vm1269, %v1350, %v1349
    %v1352 = vrot.slane %v1252, 2
    %v1353 = vsel %vm1272, %v1352, %v1351
    %v1354 = vpack.c.b16 %v1353, %v1353
    %v1359 = vunpack.c.l.b16 %v1336
    %v1360 = vunpack.c.l.b16 %v1337
    %v1361 = vunpack.c.l.b16 %v1338
    %v1362 = vunpack.c.l.b16 %v1339
    %v1363 = vpack.c.b16 %v1360, %v1359
    %v1364 = vpack.c.b16 %v1362, %v1361
    %v1368 = vsel %vm104, %v1354, 0
    %1370 = vmatprep.subr.bf16.mxu0 0
    %1371 = vmatpush1.bf16.msra.mxu0 0
    %1372 = vmatprep.subr.bf16.mxu0 0
    %1373 = vmatpush1.bf16.msra.mxu0 0
    %1374 = vmatprep.subr.bf16.mxu0 0
    %1375 = vmatpush1.bf16.msra.mxu0 0
    %1376 = vmatprep.subr.bf16.mxu0 0
    %1377 = vmatpush1.bf16.msra.mxu0 0
    %1378 = vmatprep.subr.bf16.mxu0 0
    %1379 = vmatpush1.bf16.msra.mxu0 0
    %1380 = vmatprep.subr.bf16.mxu0 0
    %1381 = vmatpush1.bf16.msra.mxu0 0
    %1382 = vmatprep.subr.bf16.mxu0 0
    %1383 = vmatpush1.bf16.msra.mxu0 %v1364
    %1384 = vmatprep.subr.bf16.mxu0 0
    %1385 = vmatpush1.bf16.msra.mxu0 %v1363
    %1386 = vmatprep.subr.bf16.mxu0 0
    %1387 = vmatpush2.bf16.msra.mxu0 0
    %1388 = vmatprep.subr.bf16.mxu0 0
    %1389 = vmatpush2.bf16.msra.mxu0 0
    %1390 = vmatprep.subr.bf16.mxu0 0
    %1391 = vmatpush2.bf16.msra.mxu0 0
    %1392 = vmatprep.subr.bf16.mxu0 0
    %1393 = vmatpush2.bf16.msra.mxu0 0
    %1394 = vmatprep.subr.bf16.mxu0 0
    %1395 = vmatpush2.bf16.msra.mxu0 0
    %1396 = vmatprep.subr.bf16.mxu0 0
    %1397 = vmatpush2.bf16.msra.mxu0 0
    %1398 = vmatprep.subr.bf16.mxu0 0
    %1399 = vmatpush2.bf16.msra.mxu0 0
    %1400 = vmatprep.subr.bf16.mxu0 0
    %1401 = vmatpush2.bf16.msra.mxu0 0
    %1402 = vmatprep.mubr.bf16.mxu0 0
    %1403 = vmatmul.mubr.bf16.gmra.mxu0 %v1368
    %v1404 = vpop.f32.mrf.mxu0
    %v1405 = vadd.f32 0.0, %v1404
    %v1406 = vpop.f32.mrf.mxu0
    %v1407 = vpop.f32.mrf.mxu0
    %v1408 = vpop.f32.mrf.mxu0
    %1409 = vdwg.mxu0
    %v1410 = vadd.f32 %v1334, %v1405
    %1411 = vst [vmem:[#allocation2] sm:$0xff] %v1410
    // Predicated region
    $region26: #{tpu_custom_call.1} parent=1 // pred_check
      _
    $region27: #{tpu_custom_call.1} parent=1 // pred_check_branch
      %1413 = sbr.rel (0) target = $region29
    $region28: #{tpu_custom_call.1} parent=1 // pred_region
      %s1415 = ssub.s32 128, 128
      %1416 = vsyncadd [#allocation3], %s1415
      %s1418 = sshll.u32 [#allocation2], 4
      %s1419 = int_to_ptr.vmem [resolvable:$true] %s1418
      %1421 = dma.vmem_to_hbm [thread:$0]  %s1419, 128, %s6, [#allocation3]
    $region29: #{tpu_custom_call.1} parent=1 // pred_fallthru
      _
    // Predicated region
    $region30: #{tpu_custom_call.1} parent=1 // pred_check
      _
    $region31: #{tpu_custom_call.1} parent=1 // pred_check_branch
      %1423 = sbr.rel (0) target = $region33
    $region32: #{tpu_custom_call.1} parent=1 // pred_region
      %1424 = dma.done [#allocation3], 128
    $region33: #{tpu_custom_call.1} parent=1 // pred_fallthru
      _
    %1425 = vsyncpa [#allocation3], 1

</llo_original>
